<compile_context>
chip_gen: v7x
topology: tpu7x:2x2x1
jax: 0.10.0
libtpu: 0.0.40
codegen_flags: <defaults>
</compile_context>

<pallas_src>
import jax
import jax.numpy as jnp
from jax.experimental import pallas as pl
from jax.experimental.pallas import tpu as pltpu


def _round_up(x, m):
    return ((x + m - 1) // m) * m


def _cdiv(a, b):
    return -(-a // b)


def _gelu_tanh(x):
    # TODO(synk): nn.GELU() default is the exact erf form; this is the tanh
    # approximation (max deviation ~1e-3), kept because it lowers cleanly.
    c = 0.7978845608028654  # sqrt(2/pi)
    return 0.5 * x * (1.0 + jnp.tanh(c * (x + 0.044715 * x * x * x)))


def _vmem_capacity_bytes():
    try:
        info = pltpu.get_tpu_info()
        cap = getattr(info, "vmem_capacity_bytes", None)
        if cap:
            return int(cap)
    except Exception:
        pass
    return 64 * 1024 * 1024  # conservative (v7x-sized) fallback


def _pick_th(h_padded, target):
    """Largest multiple of 128 that divides h_padded and is <= max(target, 128)."""
    if h_padded <= target:
        return h_padded
    target = max(128, (target // 128) * 128)
    for cand in range(target, 127, -128):
        if h_padded % cand == 0:
            return cand
    return 128


def _gated_mlp_kernel(x_ref, wgu_ref, bgu_ref, wo_ref, bo_ref, o_ref, acc_ref):
    # Grid: (i = row tile, j = hidden tile); j is the reduction axis.
    j = pl.program_id(1)

    @pl.when(j == 0)
    def _():
        acc_ref[...] = jnp.zeros_like(acc_ref)

    x = x_ref[...]                                         # (tm, D) bf16
    # One fused matmul for both the left (gate) and right (up) projections.
    lr = jnp.dot(x, wgu_ref[...], preferred_element_type=jnp.float32)
    lr = lr + bgu_ref[...].astype(jnp.float32)             # (tm, 2*th) f32
    th = lr.shape[1] // 2                                   # static, th % 128 == 0
    left = lr[:, :th]
    right = lr[:, th:]

    h = (_gelu_tanh(left) * right).astype(wo_ref.dtype)     # (tm, th) bf16
    acc_ref[...] += jnp.dot(h, wo_ref[...],
                            preferred_element_type=jnp.float32)  # (tm, D) f32

    @pl.when(j == pl.num_programs(1) - 1)
    def _():
        o_ref[...] = (acc_ref[...]
                      + bo_ref[...].astype(jnp.float32)).astype(o_ref.dtype)


def gated_mlp_block(x, w_left, b_left, w_right, b_right, w_out, b_out,
                    *, compute_dtype=jnp.bfloat16):
    """x: (..., D); w_left/w_right: (D, H); w_out: (H, D). Returns (..., D)."""
    orig_shape = x.shape
    out_dtype = x.dtype
    D = orig_shape[-1]
    H = w_left.shape[1]
    assert w_left.shape == (D, H) and w_right.shape == (D, H)
    assert b_left.shape == (H,) and b_right.shape == (H,)
    assert w_out.shape == (H, D) and b_out.shape == (D,)

    cdt = jnp.dtype(compute_dtype)
    cbytes = cdt.itemsize
    obytes = jnp.dtype(out_dtype).itemsize

    N = 1
    for s in orig_shape[:-1]:
        N *= s

    # ---- device-derived budgets ---------------------------------------
    vmem_cap = _vmem_capacity_bytes()
    big_vmem = vmem_cap >= (96 << 20)          # v5e/v6e (128 MiB) vs v7x (64 MiB)
    vmem_budget = vmem_cap - (8 << 20)
    tm_target = 768 if big_vmem else 512
    th_target = 1024 if big_vmem else 512

    # ---- row tile ------------------------------------------------------
    row_pack = 16 if cbytes < 4 else 8          # sublane pack for the MXU dtype
    n_pad = _round_up(max(N, 1), row_pack)
    tm = min(tm_target, n_pad)
    if n_pad > 512:
        # keep at least 2 row tiles so both TensorCores get work (megacore).
        tm = min(tm, _round_up(_cdiv(n_pad, 2), 256))

    # ---- hidden tile (pad H up to a lane multiple once) ----------------
    # TODO(synk): hoist this padding/interleaving to init time if the weights
    # are reused across many calls outside jit.
    Hp = _round_up(H, 128)
    pad = Hp - H
    if pad:
        # Padded hidden units: gelu(0)*0 = 0 and zero W_out rows -> contribute 0.
        w_left = jnp.pad(w_left, ((0, 0), (0, pad)))
        w_right = jnp.pad(w_right, ((0, 0), (0, pad)))
        b_left = jnp.pad(b_left, (0, pad))
        b_right = jnp.pad(b_right, (0, pad))
        w_out = jnp.pad(w_out, ((0, pad), (0, 0)))

    def vmem_bytes(tm_, th_):
        per_step = (tm_ * D * cbytes            # x block
                    + D * (2 * th_) * cbytes    # fused gate/up weight block
                    + (2 * th_) * 4             # fused gate/up bias (f32)
                    + th_ * D * cbytes          # W_out block
                    + D * 4                     # b_out (f32)
                    + tm_ * D * obytes)         # output block
        return 2 * per_step + tm_ * D * 4       # double-buffered + f32 acc

    # Prefer th = Hp (weights DMAed exactly once); otherwise tile the hidden dim.
    if vmem_bytes(tm, Hp) <= vmem_budget:
        th = Hp
    else:
        th = _pick_th(Hp, th_target)

    # Safety shrink (shrink th first -- tm is the lever that reduces HBM traffic).
    while vmem_bytes(tm, th) > vmem_budget:
        if th > 128:
            th = _pick_th(Hp, max(128, th // 2))
        else:
            new_tm = max(row_pack, (tm // 2) // row_pack * row_pack)
            if new_tm == tm:
                break
            tm = new_tm

    gi = pl.cdiv(N, tm)
    gj = Hp // th

    # ---- build fused, per-tile-interleaved gate/up weights & biases ----
    # Layout: for each hidden tile j, columns [j*2*th : j*2*th+th] are the
    # left (gate) tile and the following th columns are the right (up) tile.
    w_gu = jnp.concatenate(
        [w_left.reshape(D, gj, th), w_right.reshape(D, gj, th)], axis=2
    ).reshape(D, 2 * Hp).astype(cdt)
    b_gu = jnp.concatenate(
        [b_left.reshape(gj, th), b_right.reshape(gj, th)], axis=1
    ).reshape(1, 2 * Hp).astype(jnp.float32)
    w_out_c = w_out.astype(cdt)
    b_out2 = b_out.astype(jnp.float32).reshape(1, D)
    x2 = x.reshape(-1, D).astype(cdt)

    # Scoped VMEM limit: enough for the working set, never above physical VMEM.
    vmem_limit = int(min(vmem_cap - (4 << 20),
                         max(vmem_bytes(tm, th) + (8 << 20), 32 << 20)))

    out = pl.pallas_call(
        _gated_mlp_kernel,
        out_shape=jax.ShapeDtypeStruct((N, D), out_dtype),
        grid_spec=pltpu.PrefetchScalarGridSpec(
            num_scalar_prefetch=0,
            grid=(gi, gj),
            in_specs=[
                pl.BlockSpec((tm, D), lambda i, j: (i, 0)),        # x (resident over j)
                pl.BlockSpec((D, 2 * th), lambda i, j: (0, j)),    # fused gate/up W
                pl.BlockSpec((1, 2 * th), lambda i, j: (0, j)),    # fused gate/up b
                pl.BlockSpec((th, D), lambda i, j: (j, 0)),        # W_out
                pl.BlockSpec((1, D), lambda i, j: (0, 0)),         # b_out
            ],
            out_specs=pl.BlockSpec((tm, D), lambda i, j: (i, 0)),
            scratch_shapes=[pltpu.VMEM((tm, D), jnp.float32)],
        ),
        compiler_params=pltpu.CompilerParams(
            dimension_semantics=("parallel", "arbitrary"),
            vmem_limit_bytes=vmem_limit,
        ),
    )(x2, w_gu, b_gu, w_out_c, b_out2)

    return out.reshape(orig_shape)


if __name__ == "__main__":
    key = jax.random.PRNGKey(0)

    # Small config consistent with the module: hidden = D * M.
    D, M = 256, 3
    H = D * M
    batch, seq = 2, 8

    ks = jax.random.split(key, 7)
    x = jax.random.normal(ks[0], (batch, seq, D), dtype=jnp.float32)

    # Deterministic parameter init (nn.Linear-style uniform bounds).
    s_in = 1.0 / (D ** 0.5)
    s_h = 1.0 / (H ** 0.5)
    w_left = jax.random.uniform(ks[1], (D, H), jnp.float32, -s_in, s_in)
    b_left = jax.random.uniform(ks[2], (H,), jnp.float32, -s_in, s_in)
    w_right = jax.random.uniform(ks[3], (D, H), jnp.float32, -s_in, s_in)
    b_right = jax.random.uniform(ks[4], (H,), jnp.float32, -s_in, s_in)
    w_out = jax.random.uniform(ks[5], (H, D), jnp.float32, -s_h, s_h)
    b_out = jax.random.uniform(ks[6], (D,), jnp.float32, -s_h, s_h)

    out = gated_mlp_block(x, w_left, b_left, w_right, b_right, w_out, b_out)
    out = jax.block_until_ready(out)

    # Plain-JAX f32 reference (same tanh-approx GELU), high-precision matmuls.
    with jax.default_matmul_precision("highest"):
        left = x @ w_left + b_left
        right = x @ w_right + b_right
        ref = (_gelu_tanh(left) * right) @ w_out + b_out

    assert out.shape == x.shape and out.dtype == x.dtype
    err = float(jnp.max(jnp.abs(out - ref)))
    # Tolerance accounts for bf16 MXU operands (f32 accumulation in-kernel).
    assert err < 2.5e-2, f"max abs error {err}"
    print("KERNEL_OK")
</pallas_src>

<mosaic_0001>
module attributes {stable_mosaic.version = 11 : i64} {
  func.func @_gated_mlp_kernel(%arg0: i32, %arg1: i32, %arg2: memref<16x256xbf16, #tpu.memory_space<vmem>>, %arg3: memref<256x1536xbf16, #tpu.memory_space<vmem>>, %arg4: memref<1x1536xf32, #tpu.memory_space<vmem>>, %arg5: memref<768x256xbf16, #tpu.memory_space<vmem>>, %arg6: memref<1x256xf32, #tpu.memory_space<vmem>>, %arg7: memref<16x256xf32, #tpu.memory_space<vmem>>, %arg8: memref<16x256xf32, #tpu.memory_space<vmem>>) attributes {dimension_semantics = [#tpu.dimension_semantics<parallel>, #tpu.dimension_semantics<arbitrary>], iteration_bounds = array<i64: 1, 1>, scalar_prefetch = 0 : i64, scratch_operands = 1 : i64, tpu.core_type = #tpu.core_type<tc>, window_params = [{transform_indices = @transform_0, window_bounds = array<i64: 16, 256>}, {transform_indices = @transform_1, window_bounds = array<i64: 256, 1536>}, {transform_indices = @transform_2, window_bounds = array<i64: 1, 1536>}, {transform_indices = @transform_3, window_bounds = array<i64: 768, 256>}, {pipeline_mode = #tpu.pipeline_mode<synchronous>, transform_indices = @transform_4, window_bounds = array<i64: 1, 256>}, {transform_indices = @transform_5, window_bounds = array<i64: 16, 256>}]} {
    %c0_i32 = arith.constant 0 : i32
    %0 = arith.cmpi eq, %arg1, %c0_i32 : i32
    %1 = arith.extui %0 : i1 to i32
    %c0_i32_0 = arith.constant 0 : i32
    %2 = arith.cmpi ne, %1, %c0_i32_0 : i32
    scf.if %2 {
      %cst_19 = arith.constant 0.000000e+00 : f32
      %34 = vector.broadcast %cst_19 : f32 to vector<16x256xf32>
      %c0_20 = arith.constant 0 : index
      %c0_21 = arith.constant 0 : index
      %35 = vector.load %arg8[%c0_20, %c0_21] : memref<16x256xf32, #tpu.memory_space<vmem>>, vector<16x256xf32>
      tpu.vector_store %arg8[%c0_20, %c0_21], %34 {strides = array<i32>} : memref<16x256xf32, #tpu.memory_space<vmem>>, vector<16x256xf32>,
    } else {
    }
    %c0 = arith.constant 0 : index
    %c0_1 = arith.constant 0 : index
    %3 = vector.load %arg2[%c0, %c0_1] : memref<16x256xbf16, #tpu.memory_space<vmem>>, vector<16x256xbf16>
    %c0_2 = arith.constant 0 : index
    %c0_3 = arith.constant 0 : index
    %4 = vector.load %arg3[%c0_2, %c0_3] : memref<256x1536xbf16, #tpu.memory_space<vmem>>, vector<256x1536xbf16>
    %cst = arith.constant dense<0.000000e+00> : vector<16x1536xf32>
    %5 = tpu.matmul %3, %4, %cst {dimension_numbers = #tpu.dot_dimension_numbers<[1], [0], [0], [1], [0, 0, 1, 1], [], []>} : vector<16x256xbf16>, vector<256x1536xbf16>, vector<16x1536xf32> -> vector<16x1536xf32>
    %c0_4 = arith.constant 0 : index
    %c0_5 = arith.constant 0 : index
    %6 = vector.load %arg4[%c0_4, %c0_5] : memref<1x1536xf32, #tpu.memory_space<vmem>>, vector<1x1536xf32>
    %7 = vector.broadcast %6 : vector<1x1536xf32> to vector<16x1536xf32>
    %8 = arith.addf %5, %7 : vector<16x1536xf32>
    %9 = vector.extract_strided_slice %8 {offsets = [0, 0], sizes = [16, 768], strides = [1, 1]} : vector<16x1536xf32> to vector<16x768xf32>
    %10 = vector.extract_strided_slice %8 {offsets = [0, 768], sizes = [16, 768], strides = [1, 1]} : vector<16x1536xf32> to vector<16x768xf32>
    %cst_6 = arith.constant 5.000000e-01 : f32
    %11 = vector.broadcast %cst_6 : f32 to vector<16x768xf32>
    %12 = arith.mulf %11, %9 : vector<16x768xf32>
    %cst_7 = arith.constant 4.471500e-02 : f32
    %13 = vector.broadcast %cst_7 : f32 to vector<16x768xf32>
    %14 = arith.mulf %13, %9 : vector<16x768xf32>
    %15 = arith.mulf %14, %9 : vector<16x768xf32>
    %16 = arith.mulf %15, %9 : vector<16x768xf32>
    %17 = arith.addf %9, %16 : vector<16x768xf32>
    %cst_8 = arith.constant 0.797884583 : f32
    %18 = vector.broadcast %cst_8 : f32 to vector<16x768xf32>
    %19 = arith.mulf %18, %17 : vector<16x768xf32>
    %20 = math.tanh %19 : vector<16x768xf32>
    %cst_9 = arith.constant 1.000000e+00 : f32
    %21 = vector.broadcast %cst_9 : f32 to vector<16x768xf32>
    %22 = arith.addf %21, %20 : vector<16x768xf32>
    %23 = arith.mulf %12, %22 : vector<16x768xf32>
    %24 = arith.mulf %23, %10 : vector<16x768xf32>
    %25 = arith.truncf %24 : vector<16x768xf32> to vector<16x768xbf16>
    %c0_10 = arith.constant 0 : index
    %c0_11 = arith.constant 0 : index
    %26 = vector.load %arg8[%c0_10, %c0_11] : memref<16x256xf32, #tpu.memory_space<vmem>>, vector<16x256xf32>
    %c0_12 = arith.constant 0 : index
    %c0_13 = arith.constant 0 : index
    %27 = vector.load %arg5[%c0_12, %c0_13] : memref<768x256xbf16, #tpu.memory_space<vmem>>, vector<768x256xbf16>
    %cst_14 = arith.constant dense<0.000000e+00> : vector<16x256xf32>
    %28 = tpu.matmul %25, %27, %cst_14 {dimension_numbers = #tpu.dot_dimension_numbers<[1], [0], [0], [1], [0, 0, 1, 1], [], []>} : vector<16x768xbf16>, vector<768x256xbf16>, vector<16x256xf32> -> vector<16x256xf32>
    %29 = arith.addf %26, %28 : vector<16x256xf32>
    %c0_15 = arith.constant 0 : index
    %c0_16 = arith.constant 0 : index
    %30 = vector.load %arg8[%c0_15, %c0_16] : memref<16x256xf32, #tpu.memory_space<vmem>>, vector<16x256xf32>
    tpu.vector_store %arg8[%c0_15, %c0_16], %29 {strides = array<i32>} : memref<16x256xf32, #tpu.memory_space<vmem>>, vector<16x256xf32>,
    %c0_i32_17 = arith.constant 0 : i32
    %31 = arith.cmpi eq, %arg1, %c0_i32_17 : i32
    %32 = arith.extui %31 : i1 to i32
    %c0_i32_18 = arith.constant 0 : i32
    %33 = arith.cmpi ne, %32, %c0_i32_18 : i32
    scf.if %33 {
      %c0_19 = arith.constant 0 : index
      %c0_20 = arith.constant 0 : index
      %34 = vector.load %arg8[%c0_19, %c0_20] : memref<16x256xf32, #tpu.memory_space<vmem>>, vector<16x256xf32>
      %c0_21 = arith.constant 0 : index
      %c0_22 = arith.constant 0 : index
      %35 = vector.load %arg6[%c0_21, %c0_22] : memref<1x256xf32, #tpu.memory_space<vmem>>, vector<1x256xf32>
      %36 = vector.broadcast %35 : vector<1x256xf32> to vector<16x256xf32>
      %37 = arith.addf %34, %36 : vector<16x256xf32>
      %c0_23 = arith.constant 0 : index
      %c0_24 = arith.constant 0 : index
      %38 = vector.load %arg7[%c0_23, %c0_24] : memref<16x256xf32, #tpu.memory_space<vmem>>, vector<16x256xf32>
      tpu.vector_store %arg7[%c0_23, %c0_24], %37 {strides = array<i32>} : memref<16x256xf32, #tpu.memory_space<vmem>>, vector<16x256xf32>,
    } else {
    }
    return
  }
  func.func @transform_0(%arg0: i32, %arg1: i32) -> (i32, i32) {
    %c0_i32 = arith.constant 0 : i32
    %c0_i32_0 = arith.constant 0 : i32
    return %arg0, %c0_i32 : i32, i32
  }
  func.func @transform_1(%arg0: i32, %arg1: i32) -> (i32, i32) {
    %c0_i32 = arith.constant 0 : i32
    %c0_i32_0 = arith.constant 0 : i32
    return %c0_i32, %arg1 : i32, i32
  }
  func.func @transform_2(%arg0: i32, %arg1: i32) -> (i32, i32) {
    %c0_i32 = arith.constant 0 : i32
    %c0_i32_0 = arith.constant 0 : i32
    return %c0_i32, %arg1 : i32, i32
  }
  func.func @transform_3(%arg0: i32, %arg1: i32) -> (i32, i32) {
    %c0_i32 = arith.constant 0 : i32
    %c0_i32_0 = arith.constant 0 : i32
    return %arg1, %c0_i32 : i32, i32
  }
  func.func @transform_4(%arg0: i32, %arg1: i32) -> (i32, i32) {
    %c0_i32 = arith.constant 0 : i32
    %c0_i32_0 = arith.constant 0 : i32
    %c0_i32_1 = arith.constant 0 : i32
    return %c0_i32, %c0_i32_0 : i32, i32
  }
  func.func @transform_5(%arg0: i32, %arg1: i32) -> (i32, i32) {
    %c0_i32 = arith.constant 0 : i32
    %c0_i32_0 = arith.constant 0 : i32
    return %arg0, %c0_i32 : i32, i32
  }
}

</mosaic_0001>

<llo_original>
// kernel: tpu_custom_call.1
$region0: #{tpu_custom_call.1}
  #allocation0 [shape = 'u32[]', space=smem, size = 0x4, offset = 0x4, fixed_abs, tag = 'smem constant byte address 0x4 - core index']
  #allocation1 [shape = 'u32[144,128]{1,0:T(1,128)}', space=vmem, size = 0x12000, scoped, tag = 'internal scratch']
  #allocation2 [shape = 'f32[16,256]{1,0:T(8,128)}', space=vmem, size = 0x4000, scoped, tag = 'scratch operand']
  %s0 = inlined_call_operand.hbm [shape: bf16[16,256], index: 0, kind: input, shape index: {}]
  %s1 = inlined_call_operand.hbm [shape: bf16[256,1536], index: 1, kind: input, shape index: {}]
  %s2 = inlined_call_operand.hbm [shape: f32[1,1536], index: 2, kind: input, shape index: {}]
  %s3 = inlined_call_operand.hbm [shape: bf16[768,256], index: 3, kind: input, shape index: {}]
  %s4 = inlined_call_operand.vmem [shape: f32[1,256], index: 4, kind: input, shape index: {}]
  %s5 = inlined_call_operand.hbm [shape: f32[16,256], index: 5, kind: output, shape index: {}]
  %s6 = sld [smem:[#allocation0]]
  $region54: #{tpu_custom_call.1} parent=0
    _
  %s8 = ssub.s32 1, %s6
  %s9 = scalar_select 0, %s8, %s6
  $region1: #{tpu_custom_call.1} parent=0
    #allocation3 [shape = 'u8[8192]{0}', space=vmem, size = 0x2000, scoped, tag = 'input window, operand 0, single buffered']
    #allocation4 [shape = 's32[1]{0}', space=sflag, size = 0x4, scoped, tag = 'scoped memory for tpu_custom_call.1']
    #allocation5 [shape = 's32[1]{0}', space=sflag, size = 0x4, scoped, tag = 'scoped memory for tpu_custom_call.1']
    #allocation6 [shape = 'u8[786432]{0}', space=vmem, size = 0xc0000, scoped, tag = 'input window, operand 1, single buffered']
    #allocation7 [shape = 's32[1]{0}', space=sflag, size = 0x4, scoped, tag = 'scoped memory for tpu_custom_call.1']
    #allocation8 [shape = 'u8[6144]{0}', space=vmem, size = 0x1800, scoped, tag = 'input window, operand 2, single buffered']
    #allocation9 [shape = 'u8[393216]{0}', space=vmem, size = 0x60000, scoped, tag = 'input window, operand 3, single buffered']
    #allocation10 [shape = 's32[1]{0}', space=sflag, size = 0x4, scoped, tag = 'scoped memory for tpu_custom_call.1']
    #allocation11 [shape = 'u8[16384]{0}', space=vmem, size = 0x4000, scoped, tag = 'output window, operand 0, single buffered']
    %10 = vsyncpa [#allocation4], 0
    %11 = vsyncpa [#allocation7], 0
    %12 = vsyncpa [#allocation10], 0
    %13 = vsyncpa [#allocation5], 0
    // Predicated region
    $region2: #{tpu_custom_call.1} parent=1 // pred_check
      _
    $region3: #{tpu_custom_call.1} parent=1 // pred_check_branch
      %15 = sbr.rel (0) target = $region5
    $region4: #{tpu_custom_call.1} parent=1 // pred_region
      %s17 = ssub.s32 256, 256
      %18 = vsyncadd [#allocation4], %s17
      %s19 = sshll.u32 [#allocation3], 4
      %s20 = int_to_ptr.vmem [resolvable:$true] %s19
      %25 = dma.hbm_to_vmem [thread:$0]  %s0, 256, %s20, [#allocation4], 128, 128, 8
    $region5: #{tpu_custom_call.1} parent=1 // pred_fallthru
      _
    // Predicated region
    $region6: #{tpu_custom_call.1} parent=1 // pred_check
      _
    $region7: #{tpu_custom_call.1} parent=1 // pred_check_branch
      %27 = sbr.rel (0) target = $region9
    $region8: #{tpu_custom_call.1} parent=1 // pred_region
      %s29 = ssub.s32 24576, 24576
      %30 = vsyncadd [#allocation7], %s29
      %s31 = sshll.u32 [#allocation6], 4
      %s32 = int_to_ptr.vmem [resolvable:$true] %s31
      %37 = dma.hbm_to_vmem [thread:$0]  %s1, 24576, %s32, [#allocation7], 768, 768, 48
    $region9: #{tpu_custom_call.1} parent=1 // pred_fallthru
      _
    // Predicated region
    $region10: #{tpu_custom_call.1} parent=1 // pred_check
      _
    $region11: #{tpu_custom_call.1} parent=1 // pred_check_branch
      %39 = sbr.rel (0) target = $region13
    $region12: #{tpu_custom_call.1} parent=1 // pred_region
      %s41 = ssub.s32 192, 192
      %42 = vsyncadd [#allocation7], %s41
      %s44 = sshll.u32 [#allocation8], 4
      %s45 = int_to_ptr.vmem [resolvable:$true] %s44
      %47 = dma.hbm_to_vmem [thread:$0]  %s2, 192, %s45, [#allocation7]
    $region13: #{tpu_custom_call.1} parent=1 // pred_fallthru
      _
    // Predicated region
    $region14: #{tpu_custom_call.1} parent=1 // pred_check
      _
    $region15: #{tpu_custom_call.1} parent=1 // pred_check_branch
      %49 = sbr.rel (0) target = $region17
    $region16: #{tpu_custom_call.1} parent=1 // pred_region
      %s51 = ssub.s32 12288, 12288
      %52 = vsyncadd [#allocation10], %s51
      %s53 = sshll.u32 [#allocation9], 4
      %s54 = int_to_ptr.vmem [resolvable:$true] %s53
      %59 = dma.hbm_to_vmem [thread:$0]  %s3, 12288, %s54, [#allocation10], 128, 128, 8
    $region17: #{tpu_custom_call.1} parent=1 // pred_fallthru
      _
    // Predicated region
    $region18: #{tpu_custom_call.1} parent=1 // pred_check
      _
    $region19: #{tpu_custom_call.1} parent=1 // pred_check_branch
      %61 = sbr.rel (0) target = $region21
    $region20: #{tpu_custom_call.1} parent=1 // pred_region
      _
    $region21: #{tpu_custom_call.1} parent=1 // pred_fallthru
      _
    // Predicated region
    $region22: #{tpu_custom_call.1} parent=1 // pred_check
      _
    $region23: #{tpu_custom_call.1} parent=1 // pred_check_branch
      %63 = sbr.rel (0) target = $region25
    $region24: #{tpu_custom_call.1} parent=1 // pred_region
      %64 = dma.done [#allocation4], 256
    $region25: #{tpu_custom_call.1} parent=1 // pred_fallthru
      _
    // Predicated region
    $region26: #{tpu_custom_call.1} parent=1 // pred_check
      _
    $region27: #{tpu_custom_call.1} parent=1 // pred_check_branch
      %66 = sbr.rel (0) target = $region29
    $region28: #{tpu_custom_call.1} parent=1 // pred_region
      %67 = dma.done [#allocation7], 24576
    $region29: #{tpu_custom_call.1} parent=1 // pred_fallthru
      _
    // Predicated region
    $region30: #{tpu_custom_call.1} parent=1 // pred_check
      _
    $region31: #{tpu_custom_call.1} parent=1 // pred_check_branch
      %69 = sbr.rel (0) target = $region33
    $region32: #{tpu_custom_call.1} parent=1 // pred_region
      %70 = dma.done [#allocation7], 192
    $region33: #{tpu_custom_call.1} parent=1 // pred_fallthru
      _
    // Predicated region
    $region34: #{tpu_custom_call.1} parent=1 // pred_check
      _
    $region35: #{tpu_custom_call.1} parent=1 // pred_check_branch
      %72 = sbr.rel (0) target = $region37
    $region36: #{tpu_custom_call.1} parent=1 // pred_region
      %73 = dma.done [#allocation10], 12288
    $region37: #{tpu_custom_call.1} parent=1 // pred_fallthru
      _
    %p74 = scmp.eq.s32.totalorder 0, 0
    // Predicated region
    $region38: #{tpu_custom_call.1} parent=1 // pred_check
      %p75 = pneg %p74
    $region39: #{tpu_custom_call.1} parent=1 // pred_check_branch
      %77 = sbr.rel (%p75) target = $region41
    $region40: #{tpu_custom_call.1} parent=1 // pred_region
      %78 = vst [vmem:[#allocation2] sm:$0xff] 0.0
      %79 = vst [vmem:[#allocation2 + $0x8] sm:$0xff] 0.0
      %80 = vst [vmem:[#allocation2 + $0x10] sm:$0xff] 0.0
      %81 = vst [vmem:[#allocation2 + $0x18] sm:$0xff] 0.0
    $region41: #{tpu_custom_call.1} parent=1 // pred_fallthru
      _
    %v82 = vld [vmem:[#allocation3] sm:$0xff]
    %v83 = vld [vmem:[#allocation3 + $0x8] sm:$0xff]
    %v84 = vld [vmem:[#allocation6] sm:$0xff]
    %v85 = vld [vmem:[#allocation6 + $0x8] sm:$0xff]
    %v86 = vld [vmem:[#allocation6 + $0x10] sm:$0xff]
    %v87 = vld [vmem:[#allocation6 + $0x18] sm:$0xff]
    %v88 = vld [vmem:[#allocation6 + $0x20] sm:$0xff]
    %v89 = vld [vmem:[#allocation6 + $0x28] sm:$0xff]
    %v90 = vld [vmem:[#allocation6 + $0x30] sm:$0xff]
    %v91 = vld [vmem:[#allocation6 + $0x38] sm:$0xff]
    %v92 = vld [vmem:[#allocation6 + $0x40] sm:$0xff]
    %v93 = vld [vmem:[#allocation6 + $0x48] sm:$0xff]
    %v94 = vld [vmem:[#allocation6 + $0x50] sm:$0xff]
    %v95 = vld [vmem:[#allocation6 + $0x58] sm:$0xff]
    %v96 = vld [vmem:[#allocation6 + $0x60] sm:$0xff]
    %v97 = vld [vmem:[#allocation6 + $0x68] sm:$0xff]
    %v98 = vld [vmem:[#allocation6 + $0x70] sm:$0xff]
    %v99 = vld [vmem:[#allocation6 + $0x78] sm:$0xff]
    %v100 = vld [vmem:[#allocation6 + $0x80] sm:$0xff]
    %v101 = vld [vmem:[#allocation6 + $0x88] sm:$0xff]
    %v102 = vld [vmem:[#allocation6 + $0x90] sm:$0xff]
    %v103 = vld [vmem:[#allocation6 + $0x98] sm:$0xff]
    %v104 = vld [vmem:[#allocation6 + $0xa0] sm:$0xff]
    %v105 = vld [vmem:[#allocation6 + $0xa8] sm:$0xff]
    %v106 = vld [vmem:[#allocation6 + $0xb0] sm:$0xff]
    %v107 = vld [vmem:[#allocation6 + $0xb8] sm:$0xff]
    %v108 = vld [vmem:[#allocation6 + $0xc0] sm:$0xff]
    %v109 = vld [vmem:[#allocation6 + $0xc8] sm:$0xff]
    %v110 = vld [vmem:[#allocation6 + $0xd0] sm:$0xff]
    %v111 = vld [vmem:[#allocation6 + $0xd8] sm:$0xff]
    %v112 = vld [vmem:[#allocation6 + $0xe0] sm:$0xff]
    %v113 = vld [vmem:[#allocation6 + $0xe8] sm:$0xff]
    %v114 = vld [vmem:[#allocation6 + $0xf0] sm:$0xff]
    %v115 = vld [vmem:[#allocation6 + $0xf8] sm:$0xff]
    %v116 = vld [vmem:[#allocation6 + $0x100] sm:$0xff]
    %v117 = vld [vmem:[#allocation6 + $0x108] sm:$0xff]
    %v118 = vld [vmem:[#allocation6 + $0x110] sm:$0xff]
    %v119 = vld [vmem:[#allocation6 + $0x118] sm:$0xff]
    %v120 = vld [vmem:[#allocation6 + $0x120] sm:$0xff]
    %v121 = vld [vmem:[#allocation6 + $0x128] sm:$0xff]
    %v122 = vld [vmem:[#allocation6 + $0x130] sm:$0xff]
    %v123 = vld [vmem:[#allocation6 + $0x138] sm:$0xff]
    %v124 = vld [vmem:[#allocation6 + $0x140] sm:$0xff]
    %v125 = vld [vmem:[#allocation6 + $0x148] sm:$0xff]
    %v126 = vld [vmem:[#allocation6 + $0x150] sm:$0xff]
    %v127 = vld [vmem:[#allocation6 + $0x158] sm:$0xff]
    %v128 = vld [vmem:[#allocation6 + $0x160] sm:$0xff]
    %v129 = vld [vmem:[#allocation6 + $0x168] sm:$0xff]
    %v130 = vld [vmem:[#allocation6 + $0x170] sm:$0xff]
    %v131 = vld [vmem:[#allocation6 + $0x178] sm:$0xff]
    %v132 = vld [vmem:[#allocation6 + $0x180] sm:$0xff]
    %v133 = vld [vmem:[#allocation6 + $0x188] sm:$0xff]
    %v134 = vld [vmem:[#allocation6 + $0x190] sm:$0xff]
    %v135 = vld [vmem:[#allocation6 + $0x198] sm:$0xff]
    %v136 = vld [vmem:[#allocation6 + $0x1a0] sm:$0xff]
    %v137 = vld [vmem:[#allocation6 + $0x1a8] sm:$0xff]
    %v138 = vld [vmem:[#allocation6 + $0x1b0] sm:$0xff]
    %v139 = vld [vmem:[#allocation6 + $0x1b8] sm:$0xff]
    %v140 = vld [vmem:[#allocation6 + $0x1c0] sm:$0xff]
    %v141 = vld [vmem:[#allocation6 + $0x1c8] sm:$0xff]
    %v142 = vld [vmem:[#allocation6 + $0x1d0] sm:$0xff]
    %v143 = vld [vmem:[#allocation6 + $0x1d8] sm:$0xff]
    %v144 = vld [vmem:[#allocation6 + $0x1e0] sm:$0xff]
    %v145 = vld [vmem:[#allocation6 + $0x1e8] sm:$0xff]
    %v146 = vld [vmem:[#allocation6 + $0x1f0] sm:$0xff]
    %v147 = vld [vmem:[#allocation6 + $0x1f8] sm:$0xff]
    %v148 = vld [vmem:[#allocation6 + $0x200] sm:$0xff]
    %v149 = vld [vmem:[#allocation6 + $0x208] sm:$0xff]
    %v150 = vld [vmem:[#allocation6 + $0x210] sm:$0xff]
    %v151 = vld [vmem:[#allocation6 + $0x218] sm:$0xff]
    %v152 = vld [vmem:[#allocation6 + $0x220] sm:$0xff]
    %v153 = vld [vmem:[#allocation6 + $0x228] sm:$0xff]
    %v154 = vld [vmem:[#allocation6 + $0x230] sm:$0xff]
    %v155 = vld [vmem:[#allocation6 + $0x238] sm:$0xff]
    %v156 = vld [vmem:[#allocation6 + $0x240] sm:$0xff]
    %v157 = vld [vmem:[#allocation6 + $0x248] sm:$0xff]
    %v158 = vld [vmem:[#allocation6 + $0x250] sm:$0xff]
    %v159 = vld [vmem:[#allocation6 + $0x258] sm:$0xff]
    %v160 = vld [vmem:[#allocation6 + $0x260] sm:$0xff]
    %v161 = vld [vmem:[#allocation6 + $0x268] sm:$0xff]
    %v162 = vld [vmem:[#allocation6 + $0x270] sm:$0xff]
    %v163 = vld [vmem:[#allocation6 + $0x278] sm:$0xff]
    %v164 = vld [vmem:[#allocation6 + $0x280] sm:$0xff]
    %v165 = vld [vmem:[#allocation6 + $0x288] sm:$0xff]
    %v166 = vld [vmem:[#allocation6 + $0x290] sm:$0xff]
    %v167 = vld [vmem:[#allocation6 + $0x298] sm:$0xff]
    %v168 = vld [vmem:[#allocation6 + $0x2a0] sm:$0xff]
    %v169 = vld [vmem:[#allocation6 + $0x2a8] sm:$0xff]
    %v170 = vld [vmem:[#allocation6 + $0x2b0] sm:$0xff]
    %v171 = vld [vmem:[#allocation6 + $0x2b8] sm:$0xff]
    %v172 = vld [vmem:[#allocation6 + $0x2c0] sm:$0xff]
    %v173 = vld [vmem:[#allocation6 + $0x2c8] sm:$0xff]
    %v174 = vld [vmem:[#allocation6 + $0x2d0] sm:$0xff]
    %v175 = vld [vmem:[#allocation6 + $0x2d8] sm:$0xff]
    %v176 = vld [vmem:[#allocation6 + $0x2e0] sm:$0xff]
    %v177 = vld [vmem:[#allocation6 + $0x2e8] sm:$0xff]
    %v178 = vld [vmem:[#allocation6 + $0x2f0] sm:$0xff]
    %v179 = vld [vmem:[#allocation6 + $0x2f8] sm:$0xff]
    %v180 = vld [vmem:[#allocation6 + $0x300] sm:$0xff]
    %v181 = vld [vmem:[#allocation6 + $0x308] sm:$0xff]
    %v182 = vld [vmem:[#allocation6 + $0x310] sm:$0xff]
    %v183 = vld [vmem:[#allocation6 + $0x318] sm:$0xff]
    %v184 = vld [vmem:[#allocation6 + $0x320] sm:$0xff]
    %v185 = vld [vmem:[#allocation6 + $0x328] sm:$0xff]
    %v186 = vld [vmem:[#allocation6 + $0x330] sm:$0xff]
    %v187 = vld [vmem:[#allocation6 + $0x338] sm:$0xff]
    %v188 = vld [vmem:[#allocation6 + $0x340] sm:$0xff]
    %v189 = vld [vmem:[#allocation6 + $0x348] sm:$0xff]
    %v190 = vld [vmem:[#allocation6 + $0x350] sm:$0xff]
    %v191 = vld [vmem:[#allocation6 + $0x358] sm:$0xff]
    %v192 = vld [vmem:[#allocation6 + $0x360] sm:$0xff]
    %v193 = vld [vmem:[#allocation6 + $0x368] sm:$0xff]
    %v194 = vld [vmem:[#allocation6 + $0x370] sm:$0xff]
    %v195 = vld [vmem:[#allocation6 + $0x378] sm:$0xff]
    %v196 = vld [vmem:[#allocation6 + $0x380] sm:$0xff]
    %v197 = vld [vmem:[#allocation6 + $0x388] sm:$0xff]
    %v198 = vld [vmem:[#allocation6 + $0x390] sm:$0xff]
    %v199 = vld [vmem:[#allocation6 + $0x398] sm:$0xff]
    %v200 = vld [vmem:[#allocation6 + $0x3a0] sm:$0xff]
    %v201 = vld [vmem:[#allocation6 + $0x3a8] sm:$0xff]
    %v202 = vld [vmem:[#allocation6 + $0x3b0] sm:$0xff]
    %v203 = vld [vmem:[#allocation6 + $0x3b8] sm:$0xff]
    %v204 = vld [vmem:[#allocation6 + $0x3c0] sm:$0xff]
    %v205 = vld [vmem:[#allocation6 + $0x3c8] sm:$0xff]
    %v206 = vld [vmem:[#allocation6 + $0x3d0] sm:$0xff]
    %v207 = vld [vmem:[#allocation6 + $0x3d8] sm:$0xff]
    %v208 = vld [vmem:[#allocation6 + $0x3e0] sm:$0xff]
    %v209 = vld [vmem:[#allocation6 + $0x3e8] sm:$0xff]
    %v210 = vld [vmem:[#allocation6 + $0x3f0] sm:$0xff]
    %v211 = vld [vmem:[#allocation6 + $0x3f8] sm:$0xff]
    %v212 = vld [vmem:[#allocation6 + $0x400] sm:$0xff]
    %v213 = vld [vmem:[#allocation6 + $0x408] sm:$0xff]
    %v214 = vld [vmem:[#allocation6 + $0x410] sm:$0xff]
    %v215 = vld [vmem:[#allocation6 + $0x418] sm:$0xff]
    %v216 = vld [vmem:[#allocation6 + $0x420] sm:$0xff]
    %v217 = vld [vmem:[#allocation6 + $0x428] sm:$0xff]
    %v218 = vld [vmem:[#allocation6 + $0x430] sm:$0xff]
    %v219 = vld [vmem:[#allocation6 + $0x438] sm:$0xff]
    %v220 = vld [vmem:[#allocation6 + $0x440] sm:$0xff]
    %v221 = vld [vmem:[#allocation6 + $0x448] sm:$0xff]
    %v222 = vld [vmem:[#allocation6 + $0x450] sm:$0xff]
    %v223 = vld [vmem:[#allocation6 + $0x458] sm:$0xff]
    %v224 = vld [vmem:[#allocation6 + $0x460] sm:$0xff]
    %v225 = vld [vmem:[#allocation6 + $0x468] sm:$0xff]
    %v226 = vld [vmem:[#allocation6 + $0x470] sm:$0xff]
    %v227 = vld [vmem:[#allocation6 + $0x478] sm:$0xff]
    %v228 = vld [vmem:[#allocation6 + $0x480] sm:$0xff]
    %v229 = vld [vmem:[#allocation6 + $0x488] sm:$0xff]
    %v230 = vld [vmem:[#allocation6 + $0x490] sm:$0xff]
    %v231 = vld [vmem:[#allocation6 + $0x498] sm:$0xff]
    %v232 = vld [vmem:[#allocation6 + $0x4a0] sm:$0xff]
    %v233 = vld [vmem:[#allocation6 + $0x4a8] sm:$0xff]
    %v234 = vld [vmem:[#allocation6 + $0x4b0] sm:$0xff]
    %v235 = vld [vmem:[#allocation6 + $0x4b8] sm:$0xff]
    %v236 = vld [vmem:[#allocation6 + $0x4c0] sm:$0xff]
    %v237 = vld [vmem:[#allocation6 + $0x4c8] sm:$0xff]
    %v238 = vld [vmem:[#allocation6 + $0x4d0] sm:$0xff]
    %v239 = vld [vmem:[#allocation6 + $0x4d8] sm:$0xff]
    %v240 = vld [vmem:[#allocation6 + $0x4e0] sm:$0xff]
    %v241 = vld [vmem:[#allocation6 + $0x4e8] sm:$0xff]
    %v242 = vld [vmem:[#allocation6 + $0x4f0] sm:$0xff]
    %v243 = vld [vmem:[#allocation6 + $0x4f8] sm:$0xff]
    %v244 = vld [vmem:[#allocation6 + $0x500] sm:$0xff]
    %v245 = vld [vmem:[#allocation6 + $0x508] sm:$0xff]
    %v246 = vld [vmem:[#allocation6 + $0x510] sm:$0xff]
    %v247 = vld [vmem:[#allocation6 + $0x518] sm:$0xff]
    %v248 = vld [vmem:[#allocation6 + $0x520] sm:$0xff]
    %v249 = vld [vmem:[#allocation6 + $0x528] sm:$0xff]
    %v250 = vld [vmem:[#allocation6 + $0x530] sm:$0xff]
    %v251 = vld [vmem:[#allocation6 + $0x538] sm:$0xff]
    %v252 = vld [vmem:[#allocation6 + $0x540] sm:$0xff]
    %v253 = vld [vmem:[#allocation6 + $0x548] sm:$0xff]
    %v254 = vld [vmem:[#allocation6 + $0x550] sm:$0xff]
    %v255 = vld [vmem:[#allocation6 + $0x558] sm:$0xff]
    %v256 = vld [vmem:[#allocation6 + $0x560] sm:$0xff]
    %v257 = vld [vmem:[#allocation6 + $0x568] sm:$0xff]
    %v258 = vld [vmem:[#allocation6 + $0x570] sm:$0xff]
    %v259 = vld [vmem:[#allocation6 + $0x578] sm:$0xff]
    %v260 = vld [vmem:[#allocation6 + $0x580] sm:$0xff]
    %v261 = vld [vmem:[#allocation6 + $0x588] sm:$0xff]
    %v262 = vld [vmem:[#allocation6 + $0x590] sm:$0xff]
    %v263 = vld [vmem:[#allocation6 + $0x598] sm:$0xff]
    %v264 = vld [vmem:[#allocation6 + $0x5a0] sm:$0xff]
    %v265 = vld [vmem:[#allocation6 + $0x5a8] sm:$0xff]
    %v266 = vld [vmem:[#allocation6 + $0x5b0] sm:$0xff]
    %v267 = vld [vmem:[#allocation6 + $0x5b8] sm:$0xff]
    %v268 = vld [vmem:[#allocation6 + $0x5c0] sm:$0xff]
    %v269 = vld [vmem:[#allocation6 + $0x5c8] sm:$0xff]
    %v270 = vld [vmem:[#allocation6 + $0x5d0] sm:$0xff]
    %v271 = vld [vmem:[#allocation6 + $0x5d8] sm:$0xff]
    %v272 = vld [vmem:[#allocation6 + $0x5e0] sm:$0xff]
    %v273 = vld [vmem:[#allocation6 + $0x5e8] sm:$0xff]
    %v274 = vld [vmem:[#allocation6 + $0x5f0] sm:$0xff]
    %v275 = vld [vmem:[#allocation6 + $0x5f8] sm:$0xff]
    %v276 = vld [vmem:[#allocation8] sm:$0xff]
    %v277 = vld [vmem:[#allocation8 + $0x8] sm:$0xf]
    %v280 = vlaneseq
    %v281 = vshrl.u32 %v280, 7
    %v282 = vsub.s32 0, %v281
    %v283 = vrot.slane %v276, %v282
    %v284 = vlaneseq
    %v285 = vshrl.u32 %v284, 7
    %v286 = vsub.s32 1, %v285
    %v287 = vrot.slane %v276, %v286
    %v288 = vlaneseq
    %v289 = vshrl.u32 %v288, 7
    %v290 = vsub.s32 2, %v289
    %v291 = vrot.slane %v276, %v290
    %v292 = vlaneseq
    %v293 = vshrl.u32 %v292, 7
    %v294 = vsub.s32 3, %v293
    %v295 = vrot.slane %v276, %v294
    %v296 = vlaneseq
    %v297 = vshrl.u32 %v296, 7
    %v298 = vsub.s32 4, %v297
    %v299 = vrot.slane %v276, %v298
    %v300 = vlaneseq
    %v301 = vshrl.u32 %v300, 7
    %v302 = vsub.s32 5, %v301
    %v303 = vrot.slane %v276, %v302
    %v304 = vlaneseq
    %v305 = vshrl.u32 %v304, 7
    %v306 = vsub.s32 6, %v305
    %v307 = vrot.slane %v276, %v306
    %v308 = vlaneseq
    %v309 = vshrl.u32 %v308, 7
    %v310 = vsub.s32 7, %v309
    %v311 = vrot.slane %v276, %v310
    %v312 = vlaneseq
    %v313 = vshrl.u32 %v312, 7
    %v314 = vsub.s32 0, %v313
    %v315 = vrot.slane %v277, %v314
    %v316 = vlaneseq
    %v317 = vshrl.u32 %v316, 7
    %v318 = vsub.s32 1, %v317
    %v319 = vrot.slane %v277, %v318
    %v320 = vlaneseq
    %v321 = vshrl.u32 %v320, 7
    %v322 = vsub.s32 2, %v321
    %v323 = vrot.slane %v277, %v322
    %v324 = vlaneseq
    %v325 = vshrl.u32 %v324, 7
    %v326 = vsub.s32 3, %v325
    %v327 = vrot.slane %v277, %v326
    %v342 = vunpack.c.l.b16 %v82
    %v343 = vunpack.c.h.b16 %v82
    %v344 = vunpack.c.l.b16 %v83
    %v345 = vunpack.c.h.b16 %v83
    %v346 = vpack.c.b16 %v344, %v342
    %v347 = vpack.c.b16 %v345, %v343
    %v542 = vunpack.c.l.b16 %v84
    %v543 = vunpack.c.h.b16 %v84
    %v544 = vunpack.c.l.b16 %v85
    %v545 = vunpack.c.h.b16 %v85
    %v546 = vunpack.c.l.b16 %v86
    %v547 = vunpack.c.h.b16 %v86
    %v548 = vunpack.c.l.b16 %v87
    %v549 = vunpack.c.h.b16 %v87
    %v550 = vunpack.c.l.b16 %v88
    %v551 = vunpack.c.h.b16 %v88
    %v552 = vunpack.c.l.b16 %v89
    %v553 = vunpack.c.h.b16 %v89
    %v554 = vunpack.c.l.b16 %v90
    %v555 = vunpack.c.h.b16 %v90
    %v556 = vunpack.c.l.b16 %v91
    %v557 = vunpack.c.h.b16 %v91
    %v558 = vunpack.c.l.b16 %v92
    %v559 = vunpack.c.h.b16 %v92
    %v560 = vunpack.c.l.b16 %v93
    %v561 = vunpack.c.h.b16 %v93
    %v562 = vunpack.c.l.b16 %v94
    %v563 = vunpack.c.h.b16 %v94
    %v564 = vunpack.c.l.b16 %v95
    %v565 = vunpack.c.h.b16 %v95
    %v566 = vunpack.c.l.b16 %v96
    %v567 = vunpack.c.h.b16 %v96
    %v568 = vunpack.c.l.b16 %v97
    %v569 = vunpack.c.h.b16 %v97
    %v570 = vunpack.c.l.b16 %v98
    %v571 = vunpack.c.h.b16 %v98
    %v572 = vunpack.c.l.b16 %v99
    %v573 = vunpack.c.h.b16 %v99
    %v574 = vunpack.c.l.b16 %v100
    %v575 = vunpack.c.h.b16 %v100
    %v576 = vunpack.c.l.b16 %v101
    %v577 = vunpack.c.h.b16 %v101
    %v578 = vunpack.c.l.b16 %v102
    %v579 = vunpack.c.h.b16 %v102
    %v580 = vunpack.c.l.b16 %v103
    %v581 = vunpack.c.h.b16 %v103
    %v582 = vunpack.c.l.b16 %v104
    %v583 = vunpack.c.h.b16 %v104
    %v584 = vunpack.c.l.b16 %v105
    %v585 = vunpack.c.h.b16 %v105
    %v586 = vunpack.c.l.b16 %v106
    %v587 = vunpack.c.h.b16 %v106
    %v588 = vunpack.c.l.b16 %v107
    %v589 = vunpack.c.h.b16 %v107
    %v590 = vunpack.c.l.b16 %v108
    %v591 = vunpack.c.h.b16 %v108
    %v592 = vunpack.c.l.b16 %v109
    %v593 = vunpack.c.h.b16 %v109
    %v594 = vunpack.c.l.b16 %v110
    %v595 = vunpack.c.h.b16 %v110
    %v596 = vunpack.c.l.b16 %v111
    %v597 = vunpack.c.h.b16 %v111
    %v598 = vunpack.c.l.b16 %v112
    %v599 = vunpack.c.h.b16 %v112
    %v600 = vunpack.c.l.b16 %v113
    %v601 = vunpack.c.h.b16 %v113
    %v602 = vunpack.c.l.b16 %v114
    %v603 = vunpack.c.h.b16 %v114
    %v604 = vunpack.c.l.b16 %v115
    %v605 = vunpack.c.h.b16 %v115
    %v606 = vunpack.c.l.b16 %v116
    %v607 = vunpack.c.h.b16 %v116
    %v608 = vunpack.c.l.b16 %v117
    %v609 = vunpack.c.h.b16 %v117
    %v610 = vunpack.c.l.b16 %v118
    %v611 = vunpack.c.h.b16 %v118
    %v612 = vunpack.c.l.b16 %v119
    %v613 = vunpack.c.h.b16 %v119
    %v614 = vunpack.c.l.b16 %v120
    %v615 = vunpack.c.h.b16 %v120
    %v616 = vunpack.c.l.b16 %v121
    %v617 = vunpack.c.h.b16 %v121
    %v618 = vunpack.c.l.b16 %v122
    %v619 = vunpack.c.h.b16 %v122
    %v620 = vunpack.c.l.b16 %v123
    %v621 = vunpack.c.h.b16 %v123
    %v622 = vunpack.c.l.b16 %v124
    %v623 = vunpack.c.h.b16 %v124
    %v624 = vunpack.c.l.b16 %v125
    %v625 = vunpack.c.h.b16 %v125
    %v626 = vunpack.c.l.b16 %v126
    %v627 = vunpack.c.h.b16 %v126
    %v628 = vunpack.c.l.b16 %v127
    %v629 = vunpack.c.h.b16 %v127
    %v630 = vunpack.c.l.b16 %v128
    %v631 = vunpack.c.h.b16 %v128
    %v632 = vunpack.c.l.b16 %v129
    %v633 = vunpack.c.h.b16 %v129
    %v634 = vunpack.c.l.b16 %v130
    %v635 = vunpack.c.h.b16 %v130
    %v636 = vunpack.c.l.b16 %v131
    %v637 = vunpack.c.h.b16 %v131
    %v638 = vunpack.c.l.b16 %v132
    %v639 = vunpack.c.h.b16 %v132
    %v640 = vunpack.c.l.b16 %v133
    %v641 = vunpack.c.h.b16 %v133
    %v642 = vunpack.c.l.b16 %v134
    %v643 = vunpack.c.h.b16 %v134
    %v644 = vunpack.c.l.b16 %v135
    %v645 = vunpack.c.h.b16 %v135
    %v646 = vunpack.c.l.b16 %v136
    %v647 = vunpack.c.h.b16 %v136
    %v648 = vunpack.c.l.b16 %v137
    %v649 = vunpack.c.h.b16 %v137
    %v650 = vunpack.c.l.b16 %v138
    %v651 = vunpack.c.h.b16 %v138
    %v652 = vunpack.c.l.b16 %v139
    %v653 = vunpack.c.h.b16 %v139
    %v654 = vunpack.c.l.b16 %v140
    %v655 = vunpack.c.h.b16 %v140
    %v656 = vunpack.c.l.b16 %v141
    %v657 = vunpack.c.h.b16 %v141
    %v658 = vunpack.c.l.b16 %v142
    %v659 = vunpack.c.h.b16 %v142
    %v660 = vunpack.c.l.b16 %v143
    %v661 = vunpack.c.h.b16 %v143
    %v662 = vunpack.c.l.b16 %v144
    %v663 = vunpack.c.h.b16 %v144
    %v664 = vunpack.c.l.b16 %v145
    %v665 = vunpack.c.h.b16 %v145
    %v666 = vunpack.c.l.b16 %v146
    %v667 = vunpack.c.h.b16 %v146
    %v668 = vunpack.c.l.b16 %v147
    %v669 = vunpack.c.h.b16 %v147
    %v670 = vunpack.c.l.b16 %v148
    %v671 = vunpack.c.h.b16 %v148
    %v672 = vunpack.c.l.b16 %v149
    %v673 = vunpack.c.h.b16 %v149
    %v674 = vunpack.c.l.b16 %v150
    %v675 = vunpack.c.h.b16 %v150
    %v676 = vunpack.c.l.b16 %v151
    %v677 = vunpack.c.h.b16 %v151
    %v678 = vunpack.c.l.b16 %v152
    %v679 = vunpack.c.h.b16 %v152
    %v680 = vunpack.c.l.b16 %v153
    %v681 = vunpack.c.h.b16 %v153
    %v682 = vunpack.c.l.b16 %v154
    %v683 = vunpack.c.h.b16 %v154
    %v684 = vunpack.c.l.b16 %v155
    %v685 = vunpack.c.h.b16 %v155
    %v686 = vunpack.c.l.b16 %v156
    %v687 = vunpack.c.h.b16 %v156
    %v688 = vunpack.c.l.b16 %v157
    %v689 = vunpack.c.h.b16 %v157
    %v690 = vunpack.c.l.b16 %v158
    %v691 = vunpack.c.h.b16 %v158
    %v692 = vunpack.c.l.b16 %v159
    %v693 = vunpack.c.h.b16 %v159
    %v694 = vunpack.c.l.b16 %v160
    %v695 = vunpack.c.h.b16 %v160
    %v696 = vunpack.c.l.b16 %v161
    %v697 = vunpack.c.h.b16 %v161
    %v698 = vunpack.c.l.b16 %v162
    %v699 = vunpack.c.h.b16 %v162
    %v700 = vunpack.c.l.b16 %v163
    %v701 = vunpack.c.h.b16 %v163
    %v702 = vunpack.c.l.b16 %v164
    %v703 = vunpack.c.h.b16 %v164
    %v704 = vunpack.c.l.b16 %v165
    %v705 = vunpack.c.h.b16 %v165
    %v706 = vunpack.c.l.b16 %v166
    %v707 = vunpack.c.h.b16 %v166
    %v708 = vunpack.c.l.b16 %v167
    %v709 = vunpack.c.h.b16 %v167
    %v710 = vunpack.c.l.b16 %v168
    %v711 = vunpack.c.h.b16 %v168
    %v712 = vunpack.c.l.b16 %v169
    %v713 = vunpack.c.h.b16 %v169
    %v714 = vunpack.c.l.b16 %v170
    %v715 = vunpack.c.h.b16 %v170
    %v716 = vunpack.c.l.b16 %v171
    %v717 = vunpack.c.h.b16 %v171
    %v718 = vunpack.c.l.b16 %v172
    %v719 = vunpack.c.h.b16 %v172
    %v720 = vunpack.c.l.b16 %v173
    %v721 = vunpack.c.h.b16 %v173
    %v722 = vunpack.c.l.b16 %v174
    %v723 = vunpack.c.h.b16 %v174
    %v724 = vunpack.c.l.b16 %v175
    %v725 = vunpack.c.h.b16 %v175
    %v726 = vunpack.c.l.b16 %v176
    %v727 = vunpack.c.h.b16 %v176
    %v728 = vunpack.c.l.b16 %v177
    %v729 = vunpack.c.h.b16 %v177
    %v730 = vunpack.c.l.b16 %v178
    %v731 = vunpack.c.h.b16 %v178
    %v732 = vunpack.c.l.b16 %v179
    %v733 = vunpack.c.h.b16 %v179
    %v734 = vunpack.c.l.b16 %v180
    %v735 = vunpack.c.h.b16 %v180
    %v736 = vunpack.c.l.b16 %v181
    %v737 = vunpack.c.h.b16 %v181
    %v738 = vunpack.c.l.b16 %v182
    %v739 = vunpack.c.h.b16 %v182
    %v740 = vunpack.c.l.b16 %v183
    %v741 = vunpack.c.h.b16 %v183
    %v742 = vunpack.c.l.b16 %v184
    %v743 = vunpack.c.h.b16 %v184
    %v744 = vunpack.c.l.b16 %v185
    %v745 = vunpack.c.h.b16 %v185
    %v746 = vunpack.c.l.b16 %v186
    %v747 = vunpack.c.h.b16 %v186
    %v748 = vunpack.c.l.b16 %v187
    %v749 = vunpack.c.h.b16 %v187
    %v750 = vunpack.c.l.b16 %v188
    %v751 = vunpack.c.h.b16 %v188
    %v752 = vunpack.c.l.b16 %v189
    %v753 = vunpack.c.h.b16 %v189
    %v754 = vunpack.c.l.b16 %v190
    %v755 = vunpack.c.h.b16 %v190
    %v756 = vunpack.c.l.b16 %v191
    %v757 = vunpack.c.h.b16 %v191
    %v758 = vunpack.c.l.b16 %v192
    %v759 = vunpack.c.h.b16 %v192
    %v760 = vunpack.c.l.b16 %v193
    %v761 = vunpack.c.h.b16 %v193
    %v762 = vunpack.c.l.b16 %v194
    %v763 = vunpack.c.h.b16 %v194
    %v764 = vunpack.c.l.b16 %v195
    %v765 = vunpack.c.h.b16 %v195
    %v766 = vunpack.c.l.b16 %v196
    %v767 = vunpack.c.h.b16 %v196
    %v768 = vunpack.c.l.b16 %v197
    %v769 = vunpack.c.h.b16 %v197
    %v770 = vunpack.c.l.b16 %v198
    %v771 = vunpack.c.h.b16 %v198
    %v772 = vunpack.c.l.b16 %v199
    %v773 = vunpack.c.h.b16 %v199
    %v774 = vunpack.c.l.b16 %v200
    %v775 = vunpack.c.h.b16 %v200
    %v776 = vunpack.c.l.b16 %v201
    %v777 = vunpack.c.h.b16 %v201
    %v778 = vunpack.c.l.b16 %v202
    %v779 = vunpack.c.h.b16 %v202
    %v780 = vunpack.c.l.b16 %v203
    %v781 = vunpack.c.h.b16 %v203
    %v782 = vunpack.c.l.b16 %v204
    %v783 = vunpack.c.h.b16 %v204
    %v784 = vunpack.c.l.b16 %v205
    %v785 = vunpack.c.h.b16 %v205
    %v786 = vunpack.c.l.b16 %v206
    %v787 = vunpack.c.h.b16 %v206
    %v788 = vunpack.c.l.b16 %v207
    %v789 = vunpack.c.h.b16 %v207
    %v790 = vunpack.c.l.b16 %v208
    %v791 = vunpack.c.h.b16 %v208
    %v792 = vunpack.c.l.b16 %v209
    %v793 = vunpack.c.h.b16 %v209
    %v794 = vunpack.c.l.b16 %v210
    %v795 = vunpack.c.h.b16 %v210
    %v796 = vunpack.c.l.b16 %v211
    %v797 = vunpack.c.h.b16 %v211
    %v798 = vunpack.c.l.b16 %v212
    %v799 = vunpack.c.h.b16 %v212
    %v800 = vunpack.c.l.b16 %v213
    %v801 = vunpack.c.h.b16 %v213
    %v802 = vunpack.c.l.b16 %v214
    %v803 = vunpack.c.h.b16 %v214
    %v804 = vunpack.c.l.b16 %v215
    %v805 = vunpack.c.h.b16 %v215
    %v806 = vunpack.c.l.b16 %v216
    %v807 = vunpack.c.h.b16 %v216
    %v808 = vunpack.c.l.b16 %v217
    %v809 = vunpack.c.h.b16 %v217
    %v810 = vunpack.c.l.b16 %v218
    %v811 = vunpack.c.h.b16 %v218
    %v812 = vunpack.c.l.b16 %v219
    %v813 = vunpack.c.h.b16 %v219
    %v814 = vunpack.c.l.b16 %v220
    %v815 = vunpack.c.h.b16 %v220
    %v816 = vunpack.c.l.b16 %v221
    %v817 = vunpack.c.h.b16 %v221
    %v818 = vunpack.c.l.b16 %v222
    %v819 = vunpack.c.h.b16 %v222
    %v820 = vunpack.c.l.b16 %v223
    %v821 = vunpack.c.h.b16 %v223
    %v822 = vunpack.c.l.b16 %v224
    %v823 = vunpack.c.h.b16 %v224
    %v824 = vunpack.c.l.b16 %v225
    %v825 = vunpack.c.h.b16 %v225
    %v826 = vunpack.c.l.b16 %v226
    %v827 = vunpack.c.h.b16 %v226
    %v828 = vunpack.c.l.b16 %v227
    %v829 = vunpack.c.h.b16 %v227
    %v830 = vunpack.c.l.b16 %v228
    %v831 = vunpack.c.h.b16 %v228
    %v832 = vunpack.c.l.b16 %v229
    %v833 = vunpack.c.h.b16 %v229
    %v834 = vunpack.c.l.b16 %v230
    %v835 = vunpack.c.h.b16 %v230
    %v836 = vunpack.c.l.b16 %v231
    %v837 = vunpack.c.h.b16 %v231
    %v838 = vunpack.c.l.b16 %v232
    %v839 = vunpack.c.h.b16 %v232
    %v840 = vunpack.c.l.b16 %v233
    %v841 = vunpack.c.h.b16 %v233
    %v842 = vunpack.c.l.b16 %v234
    %v843 = vunpack.c.h.b16 %v234
    %v844 = vunpack.c.l.b16 %v235
    %v845 = vunpack.c.h.b16 %v235
    %v846 = vunpack.c.l.b16 %v236
    %v847 = vunpack.c.h.b16 %v236
    %v848 = vunpack.c.l.b16 %v237
    %v849 = vunpack.c.h.b16 %v237
    %v850 = vunpack.c.l.b16 %v238
    %v851 = vunpack.c.h.b16 %v238
    %v852 = vunpack.c.l.b16 %v239
    %v853 = vunpack.c.h.b16 %v239
    %v854 = vunpack.c.l.b16 %v240
    %v855 = vunpack.c.h.b16 %v240
    %v856 = vunpack.c.l.b16 %v241
    %v857 = vunpack.c.h.b16 %v241
    %v858 = vunpack.c.l.b16 %v242
    %v859 = vunpack.c.h.b16 %v242
    %v860 = vunpack.c.l.b16 %v243
    %v861 = vunpack.c.h.b16 %v243
    %v862 = vunpack.c.l.b16 %v244
    %v863 = vunpack.c.h.b16 %v244
    %v864 = vunpack.c.l.b16 %v245
    %v865 = vunpack.c.h.b16 %v245
    %v866 = vunpack.c.l.b16 %v246
    %v867 = vunpack.c.h.b16 %v246
    %v868 = vunpack.c.l.b16 %v247
    %v869 = vunpack.c.h.b16 %v247
    %v870 = vunpack.c.l.b16 %v248
    %v871 = vunpack.c.h.b16 %v248
    %v872 = vunpack.c.l.b16 %v249
    %v873 = vunpack.c.h.b16 %v249
    %v874 = vunpack.c.l.b16 %v250
    %v875 = vunpack.c.h.b16 %v250
    %v876 = vunpack.c.l.b16 %v251
    %v877 = vunpack.c.h.b16 %v251
    %v878 = vunpack.c.l.b16 %v252
    %v879 = vunpack.c.h.b16 %v252
    %v880 = vunpack.c.l.b16 %v253
    %v881 = vunpack.c.h.b16 %v253
    %v882 = vunpack.c.l.b16 %v254
    %v883 = vunpack.c.h.b16 %v254
    %v884 = vunpack.c.l.b16 %v255
    %v885 = vunpack.c.h.b16 %v255
    %v886 = vunpack.c.l.b16 %v256
    %v887 = vunpack.c.h.b16 %v256
    %v888 = vunpack.c.l.b16 %v257
    %v889 = vunpack.c.h.b16 %v257
    %v890 = vunpack.c.l.b16 %v258
    %v891 = vunpack.c.h.b16 %v258
    %v892 = vunpack.c.l.b16 %v259
    %v893 = vunpack.c.h.b16 %v259
    %v894 = vunpack.c.l.b16 %v260
    %v895 = vunpack.c.h.b16 %v260
    %v896 = vunpack.c.l.b16 %v261
    %v897 = vunpack.c.h.b16 %v261
    %v898 = vunpack.c.l.b16 %v262
    %v899 = vunpack.c.h.b16 %v262
    %v900 = vunpack.c.l.b16 %v263
    %v901 = vunpack.c.h.b16 %v263
    %v902 = vunpack.c.l.b16 %v264
    %v903 = vunpack.c.h.b16 %v264
    %v904 = vunpack.c.l.b16 %v265
    %v905 = vunpack.c.h.b16 %v265
    %v906 = vunpack.c.l.b16 %v266
    %v907 = vunpack.c.h.b16 %v266
    %v908 = vunpack.c.l.b16 %v267
    %v909 = vunpack.c.h.b16 %v267
    %v910 = vunpack.c.l.b16 %v268
    %v911 = vunpack.c.h.b16 %v268
    %v912 = vunpack.c.l.b16 %v269
    %v913 = vunpack.c.h.b16 %v269
    %v914 = vunpack.c.l.b16 %v270
    %v915 = vunpack.c.h.b16 %v270
    %v916 = vunpack.c.l.b16 %v271
    %v917 = vunpack.c.h.b16 %v271
    %v918 = vunpack.c.l.b16 %v272
    %v919 = vunpack.c.h.b16 %v272
    %v920 = vunpack.c.l.b16 %v273
    %v921 = vunpack.c.h.b16 %v273
    %v922 = vunpack.c.l.b16 %v274
    %v923 = vunpack.c.h.b16 %v274
    %v924 = vunpack.c.l.b16 %v275
    %v925 = vunpack.c.h.b16 %v275
    %v926 = vpack.c.b16 %v554, %v542
    %v927 = vpack.c.b16 %v555, %v543
    %v928 = vpack.c.b16 %v556, %v544
    %v929 = vpack.c.b16 %v557, %v545
    %v930 = vpack.c.b16 %v558, %v546
    %v931 = vpack.c.b16 %v559, %v547
    %v932 = vpack.c.b16 %v560, %v548
    %v933 = vpack.c.b16 %v561, %v549
    %v934 = vpack.c.b16 %v562, %v550
    %v935 = vpack.c.b16 %v563, %v551
    %v936 = vpack.c.b16 %v564, %v552
    %v937 = vpack.c.b16 %v565, %v553
    %v938 = vpack.c.b16 %v578, %v566
    %v939 = vpack.c.b16 %v579, %v567
    %v940 = vpack.c.b16 %v580, %v568
    %v941 = vpack.c.b16 %v581, %v569
    %v942 = vpack.c.b16 %v582, %v570
    %v943 = vpack.c.b16 %v583, %v571
    %v944 = vpack.c.b16 %v584, %v572
    %v945 = vpack.c.b16 %v585, %v573
    %v946 = vpack.c.b16 %v586, %v574
    %v947 = vpack.c.b16 %v587, %v575
    %v948 = vpack.c.b16 %v588, %v576
    %v949 = vpack.c.b16 %v589, %v577
    %v950 = vpack.c.b16 %v602, %v590
    %v951 = vpack.c.b16 %v603, %v591
    %v952 = vpack.c.b16 %v604, %v592
    %v953 = vpack.c.b16 %v605, %v593
    %v954 = vpack.c.b16 %v606, %v594
    %v955 = vpack.c.b16 %v607, %v595
    %v956 = vpack.c.b16 %v608, %v596
    %v957 = vpack.c.b16 %v609, %v597
    %v958 = vpack.c.b16 %v610, %v598
    %v959 = vpack.c.b16 %v611, %v599
    %v960 = vpack.c.b16 %v612, %v600
    %v961 = vpack.c.b16 %v613, %v601
    %v962 = vpack.c.b16 %v626, %v614
    %v963 = vpack.c.b16 %v627, %v615
    %v964 = vpack.c.b16 %v628, %v616
    %v965 = vpack.c.b16 %v629, %v617
    %v966 = vpack.c.b16 %v630, %v618
    %v967 = vpack.c.b16 %v631, %v619
    %v968 = vpack.c.b16 %v632, %v620
    %v969 = vpack.c.b16 %v633, %v621
    %v970 = vpack.c.b16 %v634, %v622
    %v971 = vpack.c.b16 %v635, %v623
    %v972 = vpack.c.b16 %v636, %v624
    %v973 = vpack.c.b16 %v637, %v625
    %v974 = vpack.c.b16 %v650, %v638
    %v975 = vpack.c.b16 %v651, %v639
    %v976 = vpack.c.b16 %v652, %v640
    %v977 = vpack.c.b16 %v653, %v641
    %v978 = vpack.c.b16 %v654, %v642
    %v979 = vpack.c.b16 %v655, %v643
    %v980 = vpack.c.b16 %v656, %v644
    %v981 = vpack.c.b16 %v657, %v645
    %v982 = vpack.c.b16 %v658, %v646
    %v983 = vpack.c.b16 %v659, %v647
    %v984 = vpack.c.b16 %v660, %v648
    %v985 = vpack.c.b16 %v661, %v649
    %v986 = vpack.c.b16 %v674, %v662
    %v987 = vpack.c.b16 %v675, %v663
    %v988 = vpack.c.b16 %v676, %v664
    %v989 = vpack.c.b16 %v677, %v665
    %v990 = vpack.c.b16 %v678, %v666
    %v991 = vpack.c.b16 %v679, %v667
    %v992 = vpack.c.b16 %v680, %v668
    %v993 = vpack.c.b16 %v681, %v669
    %v994 = vpack.c.b16 %v682, %v670
    %v995 = vpack.c.b16 %v683, %v671
    %v996 = vpack.c.b16 %v684, %v672
    %v997 = vpack.c.b16 %v685, %v673
    %v998 = vpack.c.b16 %v698, %v686
    %v999 = vpack.c.b16 %v699, %v687
    %v1000 = vpack.c.b16 %v700, %v688
    %v1001 = vpack.c.b16 %v701, %v689
    %v1002 = vpack.c.b16 %v702, %v690
    %v1003 = vpack.c.b16 %v703, %v691
    %v1004 = vpack.c.b16 %v704, %v692
    %v1005 = vpack.c.b16 %v705, %v693
    %v1006 = vpack.c.b16 %v706, %v694
    %v1007 = vpack.c.b16 %v707, %v695
    %v1008 = vpack.c.b16 %v708, %v696
    %v1009 = vpack.c.b16 %v709, %v697
    %v1010 = vpack.c.b16 %v722, %v710
    %v1011 = vpack.c.b16 %v723, %v711
    %v1012 = vpack.c.b16 %v724, %v712
    %v1013 = vpack.c.b16 %v725, %v713
    %v1014 = vpack.c.b16 %v726, %v714
    %v1015 = vpack.c.b16 %v727, %v715
    %v1016 = vpack.c.b16 %v728, %v716
    %v1017 = vpack.c.b16 %v729, %v717
    %v1018 = vpack.c.b16 %v730, %v718
    %v1019 = vpack.c.b16 %v731, %v719
    %v1020 = vpack.c.b16 %v732, %v720
    %v1021 = vpack.c.b16 %v733, %v721
    %v1022 = vpack.c.b16 %v746, %v734
    %v1023 = vpack.c.b16 %v747, %v735
    %v1024 = vpack.c.b16 %v748, %v736
    %v1025 = vpack.c.b16 %v749, %v737
    %v1026 = vpack.c.b16 %v750, %v738
    %v1027 = vpack.c.b16 %v751, %v739
    %v1028 = vpack.c.b16 %v752, %v740
    %v1029 = vpack.c.b16 %v753, %v741
    %v1030 = vpack.c.b16 %v754, %v742
    %v1031 = vpack.c.b16 %v755, %v743
    %v1032 = vpack.c.b16 %v756, %v744
    %v1033 = vpack.c.b16 %v757, %v745
    %v1034 = vpack.c.b16 %v770, %v758
    %v1035 = vpack.c.b16 %v771, %v759
    %v1036 = vpack.c.b16 %v772, %v760
    %v1037 = vpack.c.b16 %v773, %v761
    %v1038 = vpack.c.b16 %v774, %v762
    %v1039 = vpack.c.b16 %v775, %v763
    %v1040 = vpack.c.b16 %v776, %v764
    %v1041 = vpack.c.b16 %v777, %v765
    %v1042 = vpack.c.b16 %v778, %v766
    %v1043 = vpack.c.b16 %v779, %v767
    %v1044 = vpack.c.b16 %v780, %v768
    %v1045 = vpack.c.b16 %v781, %v769
    %v1046 = vpack.c.b16 %v794, %v782
    %v1047 = vpack.c.b16 %v795, %v783
    %v1048 = vpack.c.b16 %v796, %v784
    %v1049 = vpack.c.b16 %v797, %v785
    %v1050 = vpack.c.b16 %v798, %v786
    %v1051 = vpack.c.b16 %v799, %v787
    %v1052 = vpack.c.b16 %v800, %v788
    %v1053 = vpack.c.b16 %v801, %v789
    %v1054 = vpack.c.b16 %v802, %v790
    %v1055 = vpack.c.b16 %v803, %v791
    %v1056 = vpack.c.b16 %v804, %v792
    %v1057 = vpack.c.b16 %v805, %v793
    %v1058 = vpack.c.b16 %v818, %v806
    %v1059 = vpack.c.b16 %v819, %v807
    %v1060 = vpack.c.b16 %v820, %v808
    %v1061 = vpack.c.b16 %v821, %v809
    %v1062 = vpack.c.b16 %v822, %v810
    %v1063 = vpack.c.b16 %v823, %v811
    %v1064 = vpack.c.b16 %v824, %v812
    %v1065 = vpack.c.b16 %v825, %v813
    %v1066 = vpack.c.b16 %v826, %v814
    %v1067 = vpack.c.b16 %v827, %v815
    %v1068 = vpack.c.b16 %v828, %v816
    %v1069 = vpack.c.b16 %v829, %v817
    %v1070 = vpack.c.b16 %v842, %v830
    %v1071 = vpack.c.b16 %v843, %v831
    %v1072 = vpack.c.b16 %v844, %v832
    %v1073 = vpack.c.b16 %v845, %v833
    %v1074 = vpack.c.b16 %v846, %v834
    %v1075 = vpack.c.b16 %v847, %v835
    %v1076 = vpack.c.b16 %v848, %v836
    %v1077 = vpack.c.b16 %v849, %v837
    %v1078 = vpack.c.b16 %v850, %v838
    %v1079 = vpack.c.b16 %v851, %v839
    %v1080 = vpack.c.b16 %v852, %v840
    %v1081 = vpack.c.b16 %v853, %v841
    %v1082 = vpack.c.b16 %v866, %v854
    %v1083 = vpack.c.b16 %v867, %v855
    %v1084 = vpack.c.b16 %v868, %v856
    %v1085 = vpack.c.b16 %v869, %v857
    %v1086 = vpack.c.b16 %v870, %v858
    %v1087 = vpack.c.b16 %v871, %v859
    %v1088 = vpack.c.b16 %v872, %v860
    %v1089 = vpack.c.b16 %v873, %v861
    %v1090 = vpack.c.b16 %v874, %v862
    %v1091 = vpack.c.b16 %v875, %v863
    %v1092 = vpack.c.b16 %v876, %v864
    %v1093 = vpack.c.b16 %v877, %v865
    %v1094 = vpack.c.b16 %v890, %v878
    %v1095 = vpack.c.b16 %v891, %v879
    %v1096 = vpack.c.b16 %v892, %v880
    %v1097 = vpack.c.b16 %v893, %v881
    %v1098 = vpack.c.b16 %v894, %v882
    %v1099 = vpack.c.b16 %v895, %v883
    %v1100 = vpack.c.b16 %v896, %v884
    %v1101 = vpack.c.b16 %v897, %v885
    %v1102 = vpack.c.b16 %v898, %v886
    %v1103 = vpack.c.b16 %v899, %v887
    %v1104 = vpack.c.b16 %v900, %v888
    %v1105 = vpack.c.b16 %v901, %v889
    %v1106 = vpack.c.b16 %v914, %v902
    %v1107 = vpack.c.b16 %v915, %v903
    %v1108 = vpack.c.b16 %v916, %v904
    %v1109 = vpack.c.b16 %v917, %v905
    %v1110 = vpack.c.b16 %v918, %v906
    %v1111 = vpack.c.b16 %v919, %v907
    %v1112 = vpack.c.b16 %v920, %v908
    %v1113 = vpack.c.b16 %v921, %v909
    %v1114 = vpack.c.b16 %v922, %v910
    %v1115 = vpack.c.b16 %v923, %v911
    %v1116 = vpack.c.b16 %v924, %v912
    %v1117 = vpack.c.b16 %v925, %v913
    %1310 = vmatprep.subr.bf16.mxu0 %v927
    %1311 = vmatpush1.bf16.msra.mxu0 %v926
    %1312 = vmatprep.subr.bf16.mxu0 %v939
    %1313 = vmatpush1.bf16.msra.mxu0 %v938
    %1314 = vmatprep.subr.bf16.mxu0 %v951
    %1315 = vmatpush1.bf16.msra.mxu0 %v950
    %1316 = vmatprep.subr.bf16.mxu0 %v963
    %1317 = vmatpush1.bf16.msra.mxu0 %v962
    %1318 = vmatprep.subr.bf16.mxu0 %v975
    %1319 = vmatpush1.bf16.msra.mxu0 %v974
    %1320 = vmatprep.subr.bf16.mxu0 %v987
    %1321 = vmatpush1.bf16.msra.mxu0 %v986
    %1322 = vmatprep.subr.bf16.mxu0 %v999
    %1323 = vmatpush1.bf16.msra.mxu0 %v998
    %1324 = vmatprep.subr.bf16.mxu0 %v1011
    %1325 = vmatpush1.bf16.msra.mxu0 %v1010
    %1326 = vmatprep.subr.bf16.mxu0 %v1023
    %1327 = vmatpush1.bf16.msra.mxu0 %v1022
    %1328 = vmatprep.subr.bf16.mxu0 %v1035
    %1329 = vmatpush1.bf16.msra.mxu0 %v1034
    %1330 = vmatprep.subr.bf16.mxu0 %v1047
    %1331 = vmatpush1.bf16.msra.mxu0 %v1046
    %1332 = vmatprep.subr.bf16.mxu0 %v1059
    %1333 = vmatpush1.bf16.msra.mxu0 %v1058
    %1334 = vmatprep.subr.bf16.mxu0 %v1071
    %1335 = vmatpush1.bf16.msra.mxu0 %v1070
    %1336 = vmatprep.subr.bf16.mxu0 %v1083
    %1337 = vmatpush1.bf16.msra.mxu0 %v1082
    %1338 = vmatprep.subr.bf16.mxu0 %v1095
    %1339 = vmatpush1.bf16.msra.mxu0 %v1094
    %1340 = vmatprep.subr.bf16.mxu0 %v1107
    %1341 = vmatpush1.bf16.msra.mxu0 %v1106
    %1342 = vmatprep.mubr.bf16.mxu0 %v347
    %1343 = vmatmul.mubr.bf16.gmra.mrb[0].mxu0 %v346
    %v1344 = vpop.f32.mrb[0].mxu0
    %v1345 = vadd.f32 %v283, %v1344
    %v1346 = vpop.f32.mrb[0].mxu0
    %v1347 = vadd.f32 %v287, %v1346
    %v1348 = vpop.f32.mrb[0].mxu0
    %v1349 = vadd.f32 %v283, %v1348
    %v1350 = vpop.f32.mrb[0].mxu0
    %v1351 = vadd.f32 %v287, %v1350
    %1352 = vdwg.mxu0
    %1353 = vmatprep.subr.bf16.mxu0 %v929
    %1354 = vmatpush1.bf16.msra.mxu0 %v928
    %1355 = vmatprep.subr.bf16.mxu0 %v941
    %1356 = vmatpush1.bf16.msra.mxu0 %v940
    %1357 = vmatprep.subr.bf16.mxu0 %v953
    %1358 = vmatpush1.bf16.msra.mxu0 %v952
    %1359 = vmatprep.subr.bf16.mxu0 %v965
    %1360 = vmatpush1.bf16.msra.mxu0 %v964
    %1361 = vmatprep.subr.bf16.mxu0 %v977
    %1362 = vmatpush1.bf16.msra.mxu0 %v976
    %1363 = vmatprep.subr.bf16.mxu0 %v989
    %1364 = vmatpush1.bf16.msra.mxu0 %v988
    %1365 = vmatprep.subr.bf16.mxu0 %v1001
    %1366 = vmatpush1.bf16.msra.mxu0 %v1000
    %1367 = vmatprep.subr.bf16.mxu0 %v1013
    %1368 = vmatpush1.bf16.msra.mxu0 %v1012
    %1369 = vmatprep.subr.bf16.mxu0 %v1025
    %1370 = vmatpush1.bf16.msra.mxu0 %v1024
    %1371 = vmatprep.subr.bf16.mxu0 %v1037
    %1372 = vmatpush1.bf16.msra.mxu0 %v1036
    %1373 = vmatprep.subr.bf16.mxu0 %v1049
    %1374 = vmatpush1.bf16.msra.mxu0 %v1048
    %1375 = vmatprep.subr.bf16.mxu0 %v1061
    %1376 = vmatpush1.bf16.msra.mxu0 %v1060
    %1377 = vmatprep.subr.bf16.mxu0 %v1073
    %1378 = vmatpush1.bf16.msra.mxu0 %v1072
    %1379 = vmatprep.subr.bf16.mxu0 %v1085
    %1380 = vmatpush1.bf16.msra.mxu0 %v1084
    %1381 = vmatprep.subr.bf16.mxu0 %v1097
    %1382 = vmatpush1.bf16.msra.mxu0 %v1096
    %1383 = vmatprep.subr.bf16.mxu0 %v1109
    %1384 = vmatpush1.bf16.msra.mxu0 %v1108
    %1385 = vmatprep.mubr.bf16.mxu0 %v347
    %1386 = vmatmul.mubr.bf16.gmra.mrb[0].mxu0 %v346
    %v1387 = vpop.f32.mrb[0].mxu0
    %v1388 = vadd.f32 %v291, %v1387
    %v1389 = vpop.f32.mrb[0].mxu0
    %v1390 = vadd.f32 %v295, %v1389
    %v1391 = vpop.f32.mrb[0].mxu0
    %v1392 = vadd.f32 %v291, %v1391
    %v1393 = vpop.f32.mrb[0].mxu0
    %v1394 = vadd.f32 %v295, %v1393
    %1395 = vdwg.mxu0
    %1396 = vmatprep.subr.bf16.mxu0 %v931
    %1397 = vmatpush1.bf16.msra.mxu0 %v930
    %1398 = vmatprep.subr.bf16.mxu0 %v943
    %1399 = vmatpush1.bf16.msra.mxu0 %v942
    %1400 = vmatprep.subr.bf16.mxu0 %v955
    %1401 = vmatpush1.bf16.msra.mxu0 %v954
    %1402 = vmatprep.subr.bf16.mxu0 %v967
    %1403 = vmatpush1.bf16.msra.mxu0 %v966
    %1404 = vmatprep.subr.bf16.mxu0 %v979
    %1405 = vmatpush1.bf16.msra.mxu0 %v978
    %1406 = vmatprep.subr.bf16.mxu0 %v991
    %1407 = vmatpush1.bf16.msra.mxu0 %v990
    %1408 = vmatprep.subr.bf16.mxu0 %v1003
    %1409 = vmatpush1.bf16.msra.mxu0 %v1002
    %1410 = vmatprep.subr.bf16.mxu0 %v1015
    %1411 = vmatpush1.bf16.msra.mxu0 %v1014
    %1412 = vmatprep.subr.bf16.mxu0 %v1027
    %1413 = vmatpush1.bf16.msra.mxu0 %v1026
    %1414 = vmatprep.subr.bf16.mxu0 %v1039
    %1415 = vmatpush1.bf16.msra.mxu0 %v1038
    %1416 = vmatprep.subr.bf16.mxu0 %v1051
    %1417 = vmatpush1.bf16.msra.mxu0 %v1050
    %1418 = vmatprep.subr.bf16.mxu0 %v1063
    %1419 = vmatpush1.bf16.msra.mxu0 %v1062
    %1420 = vmatprep.subr.bf16.mxu0 %v1075
    %1421 = vmatpush1.bf16.msra.mxu0 %v1074
    %1422 = vmatprep.subr.bf16.mxu0 %v1087
    %1423 = vmatpush1.bf16.msra.mxu0 %v1086
    %1424 = vmatprep.subr.bf16.mxu0 %v1099
    %1425 = vmatpush1.bf16.msra.mxu0 %v1098
    %1426 = vmatprep.subr.bf16.mxu0 %v1111
    %1427 = vmatpush1.bf16.msra.mxu0 %v1110
    %1428 = vmatprep.mubr.bf16.mxu0 %v347
    %1429 = vmatmul.mubr.bf16.gmra.mrb[0].mxu0 %v346
    %v1430 = vpop.f32.mrb[0].mxu0
    %v1431 = vadd.f32 %v299, %v1430
    %v1432 = vpop.f32.mrb[0].mxu0
    %v1433 = vadd.f32 %v303, %v1432
    %v1434 = vpop.f32.mrb[0].mxu0
    %v1435 = vadd.f32 %v299, %v1434
    %v1436 = vpop.f32.mrb[0].mxu0
    %v1437 = vadd.f32 %v303, %v1436
    %1438 = vdwg.mxu0
    %1439 = vmatprep.subr.bf16.mxu0 %v933
    %1440 = vmatpush1.bf16.msra.mxu0 %v932
    %1441 = vmatprep.subr.bf16.mxu0 %v945
    %1442 = vmatpush1.bf16.msra.mxu0 %v944
    %1443 = vmatprep.subr.bf16.mxu0 %v957
    %1444 = vmatpush1.bf16.msra.mxu0 %v956
    %1445 = vmatprep.subr.bf16.mxu0 %v969
    %1446 = vmatpush1.bf16.msra.mxu0 %v968
    %1447 = vmatprep.subr.bf16.mxu0 %v981
    %1448 = vmatpush1.bf16.msra.mxu0 %v980
    %1449 = vmatprep.subr.bf16.mxu0 %v993
    %1450 = vmatpush1.bf16.msra.mxu0 %v992
    %1451 = vmatprep.subr.bf16.mxu0 %v1005
    %1452 = vmatpush1.bf16.msra.mxu0 %v1004
    %1453 = vmatprep.subr.bf16.mxu0 %v1017
    %1454 = vmatpush1.bf16.msra.mxu0 %v1016
    %1455 = vmatprep.subr.bf16.mxu0 %v1029
    %1456 = vmatpush1.bf16.msra.mxu0 %v1028
    %1457 = vmatprep.subr.bf16.mxu0 %v1041
    %1458 = vmatpush1.bf16.msra.mxu0 %v1040
    %1459 = vmatprep.subr.bf16.mxu0 %v1053
    %1460 = vmatpush1.bf16.msra.mxu0 %v1052
    %1461 = vmatprep.subr.bf16.mxu0 %v1065
    %1462 = vmatpush1.bf16.msra.mxu0 %v1064
    %1463 = vmatprep.subr.bf16.mxu0 %v1077
    %1464 = vmatpush1.bf16.msra.mxu0 %v1076
    %1465 = vmatprep.subr.bf16.mxu0 %v1089
    %1466 = vmatpush1.bf16.msra.mxu0 %v1088
    %1467 = vmatprep.subr.bf16.mxu0 %v1101
    %1468 = vmatpush1.bf16.msra.mxu0 %v1100
    %1469 = vmatprep.subr.bf16.mxu0 %v1113
    %1470 = vmatpush1.bf16.msra.mxu0 %v1112
    %1471 = vmatprep.mubr.bf16.mxu0 %v347
    %1472 = vmatmul.mubr.bf16.gmra.mrb[0].mxu0 %v346
    %v1473 = vpop.f32.mrb[0].mxu0
    %v1474 = vadd.f32 %v307, %v1473
    %v1475 = vpop.f32.mrb[0].mxu0
    %v1476 = vadd.f32 %v311, %v1475
    %v1477 = vpop.f32.mrb[0].mxu0
    %v1478 = vadd.f32 %v307, %v1477
    %v1479 = vpop.f32.mrb[0].mxu0
    %v1480 = vadd.f32 %v311, %v1479
    %1481 = vdwg.mxu0
    %1482 = vmatprep.subr.bf16.mxu0 %v935
    %1483 = vmatpush1.bf16.msra.mxu0 %v934
    %1484 = vmatprep.subr.bf16.mxu0 %v947
    %1485 = vmatpush1.bf16.msra.mxu0 %v946
    %1486 = vmatprep.subr.bf16.mxu0 %v959
    %1487 = vmatpush1.bf16.msra.mxu0 %v958
    %1488 = vmatprep.subr.bf16.mxu0 %v971
    %1489 = vmatpush1.bf16.msra.mxu0 %v970
    %1490 = vmatprep.subr.bf16.mxu0 %v983
    %1491 = vmatpush1.bf16.msra.mxu0 %v982
    %1492 = vmatprep.subr.bf16.mxu0 %v995
    %1493 = vmatpush1.bf16.msra.mxu0 %v994
    %1494 = vmatprep.subr.bf16.mxu0 %v1007
    %1495 = vmatpush1.bf16.msra.mxu0 %v1006
    %1496 = vmatprep.subr.bf16.mxu0 %v1019
    %1497 = vmatpush1.bf16.msra.mxu0 %v1018
    %1498 = vmatprep.subr.bf16.mxu0 %v1031
    %1499 = vmatpush1.bf16.msra.mxu0 %v1030
    %1500 = vmatprep.subr.bf16.mxu0 %v1043
    %1501 = vmatpush1.bf16.msra.mxu0 %v1042
    %1502 = vmatprep.subr.bf16.mxu0 %v1055
    %1503 = vmatpush1.bf16.msra.mxu0 %v1054
    %1504 = vmatprep.subr.bf16.mxu0 %v1067
    %1505 = vmatpush1.bf16.msra.mxu0 %v1066
    %1506 = vmatprep.subr.bf16.mxu0 %v1079
    %1507 = vmatpush1.bf16.msra.mxu0 %v1078
    %1508 = vmatprep.subr.bf16.mxu0 %v1091
    %1509 = vmatpush1.bf16.msra.mxu0 %v1090
    %1510 = vmatprep.subr.bf16.mxu0 %v1103
    %1511 = vmatpush1.bf16.msra.mxu0 %v1102
    %1512 = vmatprep.subr.bf16.mxu0 %v1115
    %1513 = vmatpush1.bf16.msra.mxu0 %v1114
    %1514 = vmatprep.mubr.bf16.mxu0 %v347
    %1515 = vmatmul.mubr.bf16.gmra.mrb[0].mxu0 %v346
    %v1516 = vpop.f32.mrb[0].mxu0
    %v1517 = vadd.f32 %v315, %v1516
    %v1518 = vpop.f32.mrb[0].mxu0
    %v1519 = vadd.f32 %v319, %v1518
    %v1520 = vpop.f32.mrb[0].mxu0
    %v1521 = vadd.f32 %v315, %v1520
    %v1522 = vpop.f32.mrb[0].mxu0
    %v1523 = vadd.f32 %v319, %v1522
    %1524 = vdwg.mxu0
    %1525 = vmatprep.subr.bf16.mxu0 %v937
    %1526 = vmatpush1.bf16.msra.mxu0 %v936
    %1527 = vmatprep.subr.bf16.mxu0 %v949
    %1528 = vmatpush1.bf16.msra.mxu0 %v948
    %1529 = vmatprep.subr.bf16.mxu0 %v961
    %1530 = vmatpush1.bf16.msra.mxu0 %v960
    %1531 = vmatprep.subr.bf16.mxu0 %v973
    %1532 = vmatpush1.bf16.msra.mxu0 %v972
    %1533 = vmatprep.subr.bf16.mxu0 %v985
    %1534 = vmatpush1.bf16.msra.mxu0 %v984
    %1535 = vmatprep.subr.bf16.mxu0 %v997
    %1536 = vmatpush1.bf16.msra.mxu0 %v996
    %1537 = vmatprep.subr.bf16.mxu0 %v1009
    %1538 = vmatpush1.bf16.msra.mxu0 %v1008
    %1539 = vmatprep.subr.bf16.mxu0 %v1021
    %1540 = vmatpush1.bf16.msra.mxu0 %v1020
    %1541 = vmatprep.subr.bf16.mxu0 %v1033
    %1542 = vmatpush1.bf16.msra.mxu0 %v1032
    %1543 = vmatprep.subr.bf16.mxu0 %v1045
    %1544 = vmatpush1.bf16.msra.mxu0 %v1044
    %1545 = vmatprep.subr.bf16.mxu0 %v1057
    %1546 = vmatpush1.bf16.msra.mxu0 %v1056
    %1547 = vmatprep.subr.bf16.mxu0 %v1069
    %1548 = vmatpush1.bf16.msra.mxu0 %v1068
    %1549 = vmatprep.subr.bf16.mxu0 %v1081
    %1550 = vmatpush1.bf16.msra.mxu0 %v1080
    %1551 = vmatprep.subr.bf16.mxu0 %v1093
    %1552 = vmatpush1.bf16.msra.mxu0 %v1092
    %1553 = vmatprep.subr.bf16.mxu0 %v1105
    %1554 = vmatpush1.bf16.msra.mxu0 %v1104
    %1555 = vmatprep.subr.bf16.mxu0 %v1117
    %1556 = vmatpush1.bf16.msra.mxu0 %v1116
    %1557 = vmatprep.mubr.bf16.mxu0 %v347
    %1558 = vmatmul.mubr.bf16.gmra.mrb[0].mxu0 %v346
    %v1559 = vpop.f32.mrb[0].mxu0
    %v1560 = vadd.f32 %v323, %v1559
    %v1561 = vpop.f32.mrb[0].mxu0
    %v1562 = vadd.f32 %v327, %v1561
    %v1563 = vpop.f32.mrb[0].mxu0
    %v1564 = vadd.f32 %v323, %v1563
    %v1565 = vpop.f32.mrb[0].mxu0
    %v1566 = vadd.f32 %v327, %v1565
    %1567 = vdwg.mxu0
    %v1568 = vmul.f32 %v1345, 0.5
    %v1569 = vmul.f32 %v1347, 0.5
    %v1570 = vmul.f32 %v1388, 0.5
    %v1571 = vmul.f32 %v1390, 0.5
    %v1572 = vmul.f32 %v1431, 0.5
    %v1573 = vmul.f32 %v1433, 0.5
    %v1574 = vmul.f32 %v1349, 0.5
    %v1575 = vmul.f32 %v1351, 0.5
    %v1576 = vmul.f32 %v1392, 0.5
    %v1577 = vmul.f32 %v1394, 0.5
    %v1578 = vmul.f32 %v1435, 0.5
    %v1579 = vmul.f32 %v1437, 0.5
    %v1580 = vmul.f32 %v1345, 0.044715
    %v1581 = vmul.f32 %v1347, 0.044715
    %v1582 = vmul.f32 %v1388, 0.044715
    %v1583 = vmul.f32 %v1390, 0.044715
    %v1584 = vmul.f32 %v1431, 0.044715
    %v1585 = vmul.f32 %v1433, 0.044715
    %v1586 = vmul.f32 %v1349, 0.044715
    %v1587 = vmul.f32 %v1351, 0.044715
    %v1588 = vmul.f32 %v1392, 0.044715
    %v1589 = vmul.f32 %v1394, 0.044715
    %v1590 = vmul.f32 %v1435, 0.044715
    %v1591 = vmul.f32 %v1437, 0.044715
    %v1592 = vmul.f32 %v1580, %v1345
    %v1593 = vmul.f32 %v1581, %v1347
    %v1594 = vmul.f32 %v1582, %v1388
    %v1595 = vmul.f32 %v1583, %v1390
    %v1596 = vmul.f32 %v1584, %v1431
    %v1597 = vmul.f32 %v1585, %v1433
    %v1598 = vmul.f32 %v1586, %v1349
    %v1599 = vmul.f32 %v1587, %v1351
    %v1600 = vmul.f32 %v1588, %v1392
    %v1601 = vmul.f32 %v1589, %v1394
    %v1602 = vmul.f32 %v1590, %v1435
    %v1603 = vmul.f32 %v1591, %v1437
    %v1604 = vmul.f32 %v1592, %v1345
    %v1605 = vmul.f32 %v1593, %v1347
    %v1606 = vmul.f32 %v1594, %v1388
    %v1607 = vmul.f32 %v1595, %v1390
    %v1608 = vmul.f32 %v1596, %v1431
    %v1609 = vmul.f32 %v1597, %v1433
    %v1610 = vmul.f32 %v1598, %v1349
    %v1611 = vmul.f32 %v1599, %v1351
    %v1612 = vmul.f32 %v1600, %v1392
    %v1613 = vmul.f32 %v1601, %v1394
    %v1614 = vmul.f32 %v1602, %v1435
    %v1615 = vmul.f32 %v1603, %v1437
    %v1616 = vadd.f32 %v1345, %v1604
    %v1617 = vadd.f32 %v1347, %v1605
    %v1618 = vadd.f32 %v1388, %v1606
    %v1619 = vadd.f32 %v1390, %v1607
    %v1620 = vadd.f32 %v1431, %v1608
    %v1621 = vadd.f32 %v1433, %v1609
    %v1622 = vadd.f32 %v1349, %v1610
    %v1623 = vadd.f32 %v1351, %v1611
    %v1624 = vadd.f32 %v1392, %v1612
    %v1625 = vadd.f32 %v1394, %v1613
    %v1626 = vadd.f32 %v1435, %v1614
    %v1627 = vadd.f32 %v1437, %v1615
    %v1628 = vmul.f32 %v1616, 0.7978846
    %v1629 = vmul.f32 %v1617, 0.7978846
    %v1630 = vmul.f32 %v1618, 0.7978846
    %v1631 = vmul.f32 %v1619, 0.7978846
    %v1632 = vmul.f32 %v1620, 0.7978846
    %v1633 = vmul.f32 %v1621, 0.7978846
    %v1634 = vmul.f32 %v1622, 0.7978846
    %v1635 = vmul.f32 %v1623, 0.7978846
    %v1636 = vmul.f32 %v1624, 0.7978846
    %v1637 = vmul.f32 %v1625, 0.7978846
    %v1638 = vmul.f32 %v1626, 0.7978846
    %v1639 = vmul.f32 %v1627, 0.7978846
    %v1640 = vtanh.pop %v1628
    %v1641 = vtanh.pop %v1629
    %v1642 = vtanh.pop %v1630
    %v1643 = vtanh.pop %v1631
    %v1644 = vtanh.pop %v1632
    %v1645 = vtanh.pop %v1633
    %v1646 = vtanh.pop %v1634
    %v1647 = vtanh.pop %v1635
    %v1648 = vtanh.pop %v1636
    %v1649 = vtanh.pop %v1637
    %v1650 = vtanh.pop %v1638
    %v1651 = vtanh.pop %v1639
    %v1652 = vadd.f32 %v1640, 1.0
    %v1653 = vadd.f32 %v1641, 1.0
    %v1654 = vadd.f32 %v1642, 1.0
    %v1655 = vadd.f32 %v1643, 1.0
    %v1656 = vadd.f32 %v1644, 1.0
    %v1657 = vadd.f32 %v1645, 1.0
    %v1658 = vadd.f32 %v1646, 1.0
    %v1659 = vadd.f32 %v1647, 1.0
    %v1660 = vadd.f32 %v1648, 1.0
    %v1661 = vadd.f32 %v1649, 1.0
    %v1662 = vadd.f32 %v1650, 1.0
    %v1663 = vadd.f32 %v1651, 1.0
    %v1664 = vmul.f32 %v1568, %v1652
    %v1665 = vmul.f32 %v1569, %v1653
    %v1666 = vmul.f32 %v1570, %v1654
    %v1667 = vmul.f32 %v1571, %v1655
    %v1668 = vmul.f32 %v1572, %v1656
    %v1669 = vmul.f32 %v1573, %v1657
    %v1670 = vmul.f32 %v1574, %v1658
    %v1671 = vmul.f32 %v1575, %v1659
    %v1672 = vmul.f32 %v1576, %v1660
    %v1673 = vmul.f32 %v1577, %v1661
    %v1674 = vmul.f32 %v1578, %v1662
    %v1675 = vmul.f32 %v1579, %v1663
    %v1676 = vmul.f32 %v1664, %v1474
    %v1677 = vmul.f32 %v1665, %v1476
    %v1678 = vmul.f32 %v1666, %v1517
    %v1679 = vmul.f32 %v1667, %v1519
    %v1680 = vmul.f32 %v1668, %v1560
    %v1681 = vmul.f32 %v1669, %v1562
    %v1682 = vmul.f32 %v1670, %v1478
    %v1683 = vmul.f32 %v1671, %v1480
    %v1684 = vmul.f32 %v1672, %v1521
    %v1685 = vmul.f32 %v1673, %v1523
    %v1686 = vmul.f32 %v1674, %v1564
    %v1687 = vmul.f32 %v1675, %v1566
    %v1688 = vpack.c.bf16 %v1682, %v1676
    %v1689 = vpack.c.bf16 %v1683, %v1677
    %v1690 = vpack.c.bf16 %v1684, %v1678
    %v1691 = vpack.c.bf16 %v1685, %v1679
    %v1692 = vpack.c.bf16 %v1686, %v1680
    %v1693 = vpack.c.bf16 %v1687, %v1681
    %v1694 = vld [vmem:[#allocation2] sm:$0xff]
    %v1695 = vld [vmem:[#allocation2 + $0x8] sm:$0xff]
    %v1696 = vld [vmem:[#allocation2 + $0x10] sm:$0xff]
    %v1697 = vld [vmem:[#allocation2 + $0x18] sm:$0xff]
    %v1698 = vld [vmem:[#allocation9] sm:$0xff]
    %v1699 = vld [vmem:[#allocation9 + $0x8] sm:$0xff]
    %v1700 = vld [vmem:[#allocation9 + $0x10] sm:$0xff]
    %v1701 = vld [vmem:[#allocation9 + $0x18] sm:$0xff]
    %v1702 = vld [vmem:[#allocation9 + $0x20] sm:$0xff]
    %v1703 = vld [vmem:[#allocation9 + $0x28] sm:$0xff]
    %v1704 = vld [vmem:[#allocation9 + $0x30] sm:$0xff]
    %v1705 = vld [vmem:[#allocation9 + $0x38] sm:$0xff]
    %v1706 = vld [vmem:[#allocation9 + $0x40] sm:$0xff]
    %v1707 = vld [vmem:[#allocation9 + $0x48] sm:$0xff]
    %v1708 = vld [vmem:[#allocation9 + $0x50] sm:$0xff]
    %v1709 = vld [vmem:[#allocation9 + $0x58] sm:$0xff]
    %v1710 = vld [vmem:[#allocation9 + $0x60] sm:$0xff]
    %v1711 = vld [vmem:[#allocation9 + $0x68] sm:$0xff]
    %v1712 = vld [vmem:[#allocation9 + $0x70] sm:$0xff]
    %v1713 = vld [vmem:[#allocation9 + $0x78] sm:$0xff]
    %v1714 = vld [vmem:[#allocation9 + $0x80] sm:$0xff]
    %v1715 = vld [vmem:[#allocation9 + $0x88] sm:$0xff]
    %v1716 = vld [vmem:[#allocation9 + $0x90] sm:$0xff]
    %v1717 = vld [vmem:[#allocation9 + $0x98] sm:$0xff]
    %v1718 = vld [vmem:[#allocation9 + $0xa0] sm:$0xff]
    %v1719 = vld [vmem:[#allocation9 + $0xa8] sm:$0xff]
    %v1720 = vld [vmem:[#allocation9 + $0xb0] sm:$0xff]
    %v1721 = vld [vmem:[#allocation9 + $0xb8] sm:$0xff]
    %v1722 = vld [vmem:[#allocation9 + $0xc0] sm:$0xff]
    %v1723 = vld [vmem:[#allocation9 + $0xc8] sm:$0xff]
    %v1724 = vld [vmem:[#allocation9 + $0xd0] sm:$0xff]
    %v1725 = vld [vmem:[#allocation9 + $0xd8] sm:$0xff]
    %v1726 = vld [vmem:[#allocation9 + $0xe0] sm:$0xff]
    %v1727 = vld [vmem:[#allocation9 + $0xe8] sm:$0xff]
    %v1728 = vld [vmem:[#allocation9 + $0xf0] sm:$0xff]
    %v1729 = vld [vmem:[#allocation9 + $0xf8] sm:$0xff]
    %v1730 = vld [vmem:[#allocation9 + $0x100] sm:$0xff]
    %v1731 = vld [vmem:[#allocation9 + $0x108] sm:$0xff]
    %v1732 = vld [vmem:[#allocation9 + $0x110] sm:$0xff]
    %v1733 = vld [vmem:[#allocation9 + $0x118] sm:$0xff]
    %v1734 = vld [vmem:[#allocation9 + $0x120] sm:$0xff]
    %v1735 = vld [vmem:[#allocation9 + $0x128] sm:$0xff]
    %v1736 = vld [vmem:[#allocation9 + $0x130] sm:$0xff]
    %v1737 = vld [vmem:[#allocation9 + $0x138] sm:$0xff]
    %v1738 = vld [vmem:[#allocation9 + $0x140] sm:$0xff]
    %v1739 = vld [vmem:[#allocation9 + $0x148] sm:$0xff]
    %v1740 = vld [vmem:[#allocation9 + $0x150] sm:$0xff]
    %v1741 = vld [vmem:[#allocation9 + $0x158] sm:$0xff]
    %v1742 = vld [vmem:[#allocation9 + $0x160] sm:$0xff]
    %v1743 = vld [vmem:[#allocation9 + $0x168] sm:$0xff]
    %v1744 = vld [vmem:[#allocation9 + $0x170] sm:$0xff]
    %v1745 = vld [vmem:[#allocation9 + $0x178] sm:$0xff]
    %v1746 = vld [vmem:[#allocation9 + $0x180] sm:$0xff]
    %v1747 = vld [vmem:[#allocation9 + $0x188] sm:$0xff]
    %v1748 = vld [vmem:[#allocation9 + $0x190] sm:$0xff]
    %v1749 = vld [vmem:[#allocation9 + $0x198] sm:$0xff]
    %v1750 = vld [vmem:[#allocation9 + $0x1a0] sm:$0xff]
    %v1751 = vld [vmem:[#allocation9 + $0x1a8] sm:$0xff]
    %v1752 = vld [vmem:[#allocation9 + $0x1b0] sm:$0xff]
    %v1753 = vld [vmem:[#allocation9 + $0x1b8] sm:$0xff]
    %v1754 = vld [vmem:[#allocation9 + $0x1c0] sm:$0xff]
    %v1755 = vld [vmem:[#allocation9 + $0x1c8] sm:$0xff]
    %v1756 = vld [vmem:[#allocation9 + $0x1d0] sm:$0xff]
    %v1757 = vld [vmem:[#allocation9 + $0x1d8] sm:$0xff]
    %v1758 = vld [vmem:[#allocation9 + $0x1e0] sm:$0xff]
    %v1759 = vld [vmem:[#allocation9 + $0x1e8] sm:$0xff]
    %v1760 = vld [vmem:[#allocation9 + $0x1f0] sm:$0xff]
    %v1761 = vld [vmem:[#allocation9 + $0x1f8] sm:$0xff]
    %v1762 = vld [vmem:[#allocation9 + $0x200] sm:$0xff]
    %v1763 = vld [vmem:[#allocation9 + $0x208] sm:$0xff]
    %v1764 = vld [vmem:[#allocation9 + $0x210] sm:$0xff]
    %v1765 = vld [vmem:[#allocation9 + $0x218] sm:$0xff]
    %v1766 = vld [vmem:[#allocation9 + $0x220] sm:$0xff]
    %v1767 = vld [vmem:[#allocation9 + $0x228] sm:$0xff]
    %v1768 = vld [vmem:[#allocation9 + $0x230] sm:$0xff]
    %v1769 = vld [vmem:[#allocation9 + $0x238] sm:$0xff]
    %v1770 = vld [vmem:[#allocation9 + $0x240] sm:$0xff]
    %v1771 = vld [vmem:[#allocation9 + $0x248] sm:$0xff]
    %v1772 = vld [vmem:[#allocation9 + $0x250] sm:$0xff]
    %v1773 = vld [vmem:[#allocation9 + $0x258] sm:$0xff]
    %v1774 = vld [vmem:[#allocation9 + $0x260] sm:$0xff]
    %v1775 = vld [vmem:[#allocation9 + $0x268] sm:$0xff]
    %v1776 = vld [vmem:[#allocation9 + $0x270] sm:$0xff]
    %v1777 = vld [vmem:[#allocation9 + $0x278] sm:$0xff]
    %v1778 = vld [vmem:[#allocation9 + $0x280] sm:$0xff]
    %v1779 = vld [vmem:[#allocation9 + $0x288] sm:$0xff]
    %v1780 = vld [vmem:[#allocation9 + $0x290] sm:$0xff]
    %v1781 = vld [vmem:[#allocation9 + $0x298] sm:$0xff]
    %v1782 = vld [vmem:[#allocation9 + $0x2a0] sm:$0xff]
    %v1783 = vld [vmem:[#allocation9 + $0x2a8] sm:$0xff]
    %v1784 = vld [vmem:[#allocation9 + $0x2b0] sm:$0xff]
    %v1785 = vld [vmem:[#allocation9 + $0x2b8] sm:$0xff]
    %v1786 = vld [vmem:[#allocation9 + $0x2c0] sm:$0xff]
    %v1787 = vld [vmem:[#allocation9 + $0x2c8] sm:$0xff]
    %v1788 = vld [vmem:[#allocation9 + $0x2d0] sm:$0xff]
    %v1789 = vld [vmem:[#allocation9 + $0x2d8] sm:$0xff]
    %v1790 = vld [vmem:[#allocation9 + $0x2e0] sm:$0xff]
    %v1791 = vld [vmem:[#allocation9 + $0x2e8] sm:$0xff]
    %v1792 = vld [vmem:[#allocation9 + $0x2f0] sm:$0xff]
    %v1793 = vld [vmem:[#allocation9 + $0x2f8] sm:$0xff]
    %v1890 = vunpack.c.l.b16 %v1698
    %v1891 = vunpack.c.h.b16 %v1698
    %v1892 = vunpack.c.l.b16 %v1699
    %v1893 = vunpack.c.h.b16 %v1699
    %v1894 = vunpack.c.l.b16 %v1700
    %v1895 = vunpack.c.h.b16 %v1700
    %v1896 = vunpack.c.l.b16 %v1701
    %v1897 = vunpack.c.h.b16 %v1701
    %v1898 = vunpack.c.l.b16 %v1702
    %v1899 = vunpack.c.h.b16 %v1702
    %v1900 = vunpack.c.l.b16 %v1703
    %v1901 = vunpack.c.h.b16 %v1703
    %v1902 = vunpack.c.l.b16 %v1704
    %v1903 = vunpack.c.h.b16 %v1704
    %v1904 = vunpack.c.l.b16 %v1705
    %v1905 = vunpack.c.h.b16 %v1705
    %v1906 = vunpack.c.l.b16 %v1706
    %v1907 = vunpack.c.h.b16 %v1706
    %v1908 = vunpack.c.l.b16 %v1707
    %v1909 = vunpack.c.h.b16 %v1707
    %v1910 = vunpack.c.l.b16 %v1708
    %v1911 = vunpack.c.h.b16 %v1708
    %v1912 = vunpack.c.l.b16 %v1709
    %v1913 = vunpack.c.h.b16 %v1709
    %v1914 = vunpack.c.l.b16 %v1710
    %v1915 = vunpack.c.h.b16 %v1710
    %v1916 = vunpack.c.l.b16 %v1711
    %v1917 = vunpack.c.h.b16 %v1711
    %v1918 = vunpack.c.l.b16 %v1712
    %v1919 = vunpack.c.h.b16 %v1712
    %v1920 = vunpack.c.l.b16 %v1713
    %v1921 = vunpack.c.h.b16 %v1713
    %v1922 = vunpack.c.l.b16 %v1714
    %v1923 = vunpack.c.h.b16 %v1714
    %v1924 = vunpack.c.l.b16 %v1715
    %v1925 = vunpack.c.h.b16 %v1715
    %v1926 = vunpack.c.l.b16 %v1716
    %v1927 = vunpack.c.h.b16 %v1716
    %v1928 = vunpack.c.l.b16 %v1717
    %v1929 = vunpack.c.h.b16 %v1717
    %v1930 = vunpack.c.l.b16 %v1718
    %v1931 = vunpack.c.h.b16 %v1718
    %v1932 = vunpack.c.l.b16 %v1719
    %v1933 = vunpack.c.h.b16 %v1719
    %v1934 = vunpack.c.l.b16 %v1720
    %v1935 = vunpack.c.h.b16 %v1720
    %v1936 = vunpack.c.l.b16 %v1721
    %v1937 = vunpack.c.h.b16 %v1721
    %v1938 = vunpack.c.l.b16 %v1722
    %v1939 = vunpack.c.h.b16 %v1722
    %v1940 = vunpack.c.l.b16 %v1723
    %v1941 = vunpack.c.h.b16 %v1723
    %v1942 = vunpack.c.l.b16 %v1724
    %v1943 = vunpack.c.h.b16 %v1724
    %v1944 = vunpack.c.l.b16 %v1725
    %v1945 = vunpack.c.h.b16 %v1725
    %v1946 = vunpack.c.l.b16 %v1726
    %v1947 = vunpack.c.h.b16 %v1726
    %v1948 = vunpack.c.l.b16 %v1727
    %v1949 = vunpack.c.h.b16 %v1727
    %v1950 = vunpack.c.l.b16 %v1728
    %v1951 = vunpack.c.h.b16 %v1728
    %v1952 = vunpack.c.l.b16 %v1729
    %v1953 = vunpack.c.h.b16 %v1729
    %v1954 = vunpack.c.l.b16 %v1730
    %v1955 = vunpack.c.h.b16 %v1730
    %v1956 = vunpack.c.l.b16 %v1731
    %v1957 = vunpack.c.h.b16 %v1731
    %v1958 = vunpack.c.l.b16 %v1732
    %v1959 = vunpack.c.h.b16 %v1732
    %v1960 = vunpack.c.l.b16 %v1733
    %v1961 = vunpack.c.h.b16 %v1733
    %v1962 = vunpack.c.l.b16 %v1734
    %v1963 = vunpack.c.h.b16 %v1734
    %v1964 = vunpack.c.l.b16 %v1735
    %v1965 = vunpack.c.h.b16 %v1735
    %v1966 = vunpack.c.l.b16 %v1736
    %v1967 = vunpack.c.h.b16 %v1736
    %v1968 = vunpack.c.l.b16 %v1737
    %v1969 = vunpack.c.h.b16 %v1737
    %v1970 = vunpack.c.l.b16 %v1738
    %v1971 = vunpack.c.h.b16 %v1738
    %v1972 = vunpack.c.l.b16 %v1739
    %v1973 = vunpack.c.h.b16 %v1739
    %v1974 = vunpack.c.l.b16 %v1740
    %v1975 = vunpack.c.h.b16 %v1740
    %v1976 = vunpack.c.l.b16 %v1741
    %v1977 = vunpack.c.h.b16 %v1741
    %v1978 = vunpack.c.l.b16 %v1742
    %v1979 = vunpack.c.h.b16 %v1742
    %v1980 = vunpack.c.l.b16 %v1743
    %v1981 = vunpack.c.h.b16 %v1743
    %v1982 = vunpack.c.l.b16 %v1744
    %v1983 = vunpack.c.h.b16 %v1744
    %v1984 = vunpack.c.l.b16 %v1745
    %v1985 = vunpack.c.h.b16 %v1745
    %v1986 = vunpack.c.l.b16 %v1746
    %v1987 = vunpack.c.h.b16 %v1746
    %v1988 = vunpack.c.l.b16 %v1747
    %v1989 = vunpack.c.h.b16 %v1747
    %v1990 = vunpack.c.l.b16 %v1748
    %v1991 = vunpack.c.h.b16 %v1748
    %v1992 = vunpack.c.l.b16 %v1749
    %v1993 = vunpack.c.h.b16 %v1749
    %v1994 = vunpack.c.l.b16 %v1750
    %v1995 = vunpack.c.h.b16 %v1750
    %v1996 = vunpack.c.l.b16 %v1751
    %v1997 = vunpack.c.h.b16 %v1751
    %v1998 = vunpack.c.l.b16 %v1752
    %v1999 = vunpack.c.h.b16 %v1752
    %v2000 = vunpack.c.l.b16 %v1753
    %v2001 = vunpack.c.h.b16 %v1753
    %v2002 = vunpack.c.l.b16 %v1754
    %v2003 = vunpack.c.h.b16 %v1754
    %v2004 = vunpack.c.l.b16 %v1755
    %v2005 = vunpack.c.h.b16 %v1755
    %v2006 = vunpack.c.l.b16 %v1756
    %v2007 = vunpack.c.h.b16 %v1756
    %v2008 = vunpack.c.l.b16 %v1757
    %v2009 = vunpack.c.h.b16 %v1757
    %v2010 = vunpack.c.l.b16 %v1758
    %v2011 = vunpack.c.h.b16 %v1758
    %v2012 = vunpack.c.l.b16 %v1759
    %v2013 = vunpack.c.h.b16 %v1759
    %v2014 = vunpack.c.l.b16 %v1760
    %v2015 = vunpack.c.h.b16 %v1760
    %v2016 = vunpack.c.l.b16 %v1761
    %v2017 = vunpack.c.h.b16 %v1761
    %v2018 = vunpack.c.l.b16 %v1762
    %v2019 = vunpack.c.h.b16 %v1762
    %v2020 = vunpack.c.l.b16 %v1763
    %v2021 = vunpack.c.h.b16 %v1763
    %v2022 = vunpack.c.l.b16 %v1764
    %v2023 = vunpack.c.h.b16 %v1764
    %v2024 = vunpack.c.l.b16 %v1765
    %v2025 = vunpack.c.h.b16 %v1765
    %v2026 = vunpack.c.l.b16 %v1766
    %v2027 = vunpack.c.h.b16 %v1766
    %v2028 = vunpack.c.l.b16 %v1767
    %v2029 = vunpack.c.h.b16 %v1767
    %v2030 = vunpack.c.l.b16 %v1768
    %v2031 = vunpack.c.h.b16 %v1768
    %v2032 = vunpack.c.l.b16 %v1769
    %v2033 = vunpack.c.h.b16 %v1769
    %v2034 = vunpack.c.l.b16 %v1770
    %v2035 = vunpack.c.h.b16 %v1770
    %v2036 = vunpack.c.l.b16 %v1771
    %v2037 = vunpack.c.h.b16 %v1771
    %v2038 = vunpack.c.l.b16 %v1772
    %v2039 = vunpack.c.h.b16 %v1772
    %v2040 = vunpack.c.l.b16 %v1773
    %v2041 = vunpack.c.h.b16 %v1773
    %v2042 = vunpack.c.l.b16 %v1774
    %v2043 = vunpack.c.h.b16 %v1774
    %v2044 = vunpack.c.l.b16 %v1775
    %v2045 = vunpack.c.h.b16 %v1775
    %v2046 = vunpack.c.l.b16 %v1776
    %v2047 = vunpack.c.h.b16 %v1776
    %v2048 = vunpack.c.l.b16 %v1777
    %v2049 = vunpack.c.h.b16 %v1777
    %v2050 = vunpack.c.l.b16 %v1778
    %v2051 = vunpack.c.h.b16 %v1778
    %v2052 = vunpack.c.l.b16 %v1779
    %v2053 = vunpack.c.h.b16 %v1779
    %v2054 = vunpack.c.l.b16 %v1780
    %v2055 = vunpack.c.h.b16 %v1780
    %v2056 = vunpack.c.l.b16 %v1781
    %v2057 = vunpack.c.h.b16 %v1781
    %v2058 = vunpack.c.l.b16 %v1782
    %v2059 = vunpack.c.h.b16 %v1782
    %v2060 = vunpack.c.l.b16 %v1783
    %v2061 = vunpack.c.h.b16 %v1783
    %v2062 = vunpack.c.l.b16 %v1784
    %v2063 = vunpack.c.h.b16 %v1784
    %v2064 = vunpack.c.l.b16 %v1785
    %v2065 = vunpack.c.h.b16 %v1785
    %v2066 = vunpack.c.l.b16 %v1786
    %v2067 = vunpack.c.h.b16 %v1786
    %v2068 = vunpack.c.l.b16 %v1787
    %v2069 = vunpack.c.h.b16 %v1787
    %v2070 = vunpack.c.l.b16 %v1788
    %v2071 = vunpack.c.h.b16 %v1788
    %v2072 = vunpack.c.l.b16 %v1789
    %v2073 = vunpack.c.h.b16 %v1789
    %v2074 = vunpack.c.l.b16 %v1790
    %v2075 = vunpack.c.h.b16 %v1790
    %v2076 = vunpack.c.l.b16 %v1791
    %v2077 = vunpack.c.h.b16 %v1791
    %v2078 = vunpack.c.l.b16 %v1792
    %v2079 = vunpack.c.h.b16 %v1792
    %v2080 = vunpack.c.l.b16 %v1793
    %v2081 = vunpack.c.h.b16 %v1793
    %v2082 = vpack.c.b16 %v1892, %v1890
    %v2083 = vpack.c.b16 %v1893, %v1891
    %v2084 = vpack.c.b16 %v1896, %v1894
    %v2085 = vpack.c.b16 %v1897, %v1895
    %v2086 = vpack.c.b16 %v1900, %v1898
    %v2087 = vpack.c.b16 %v1901, %v1899
    %v2088 = vpack.c.b16 %v1904, %v1902
    %v2089 = vpack.c.b16 %v1905, %v1903
    %v2090 = vpack.c.b16 %v1908, %v1906
    %v2091 = vpack.c.b16 %v1909, %v1907
    %v2092 = vpack.c.b16 %v1912, %v1910
    %v2093 = vpack.c.b16 %v1913, %v1911
    %v2094 = vpack.c.b16 %v1916, %v1914
    %v2095 = vpack.c.b16 %v1917, %v1915
    %v2096 = vpack.c.b16 %v1920, %v1918
    %v2097 = vpack.c.b16 %v1921, %v1919
    %v2098 = vpack.c.b16 %v1924, %v1922
    %v2099 = vpack.c.b16 %v1925, %v1923
    %v2100 = vpack.c.b16 %v1928, %v1926
    %v2101 = vpack.c.b16 %v1929, %v1927
    %v2102 = vpack.c.b16 %v1932, %v1930
    %v2103 = vpack.c.b16 %v1933, %v1931
    %v2104 = vpack.c.b16 %v1936, %v1934
    %v2105 = vpack.c.b16 %v1937, %v1935
    %v2106 = vpack.c.b16 %v1940, %v1938
    %v2107 = vpack.c.b16 %v1941, %v1939
    %v2108 = vpack.c.b16 %v1944, %v1942
    %v2109 = vpack.c.b16 %v1945, %v1943
    %v2110 = vpack.c.b16 %v1948, %v1946
    %v2111 = vpack.c.b16 %v1949, %v1947
    %v2112 = vpack.c.b16 %v1952, %v1950
    %v2113 = vpack.c.b16 %v1953, %v1951
    %v2114 = vpack.c.b16 %v1956, %v1954
    %v2115 = vpack.c.b16 %v1957, %v1955
    %v2116 = vpack.c.b16 %v1960, %v1958
    %v2117 = vpack.c.b16 %v1961, %v1959
    %v2118 = vpack.c.b16 %v1964, %v1962
    %v2119 = vpack.c.b16 %v1965, %v1963
    %v2120 = vpack.c.b16 %v1968, %v1966
    %v2121 = vpack.c.b16 %v1969, %v1967
    %v2122 = vpack.c.b16 %v1972, %v1970
    %v2123 = vpack.c.b16 %v1973, %v1971
    %v2124 = vpack.c.b16 %v1976, %v1974
    %v2125 = vpack.c.b16 %v1977, %v1975
    %v2126 = vpack.c.b16 %v1980, %v1978
    %v2127 = vpack.c.b16 %v1981, %v1979
    %v2128 = vpack.c.b16 %v1984, %v1982
    %v2129 = vpack.c.b16 %v1985, %v1983
    %v2130 = vpack.c.b16 %v1988, %v1986
    %v2131 = vpack.c.b16 %v1989, %v1987
    %v2132 = vpack.c.b16 %v1992, %v1990
    %v2133 = vpack.c.b16 %v1993, %v1991
    %v2134 = vpack.c.b16 %v1996, %v1994
    %v2135 = vpack.c.b16 %v1997, %v1995
    %v2136 = vpack.c.b16 %v2000, %v1998
    %v2137 = vpack.c.b16 %v2001, %v1999
    %v2138 = vpack.c.b16 %v2004, %v2002
    %v2139 = vpack.c.b16 %v2005, %v2003
    %v2140 = vpack.c.b16 %v2008, %v2006
    %v2141 = vpack.c.b16 %v2009, %v2007
    %v2142 = vpack.c.b16 %v2012, %v2010
    %v2143 = vpack.c.b16 %v2013, %v2011
    %v2144 = vpack.c.b16 %v2016, %v2014
    %v2145 = vpack.c.b16 %v2017, %v2015
    %v2146 = vpack.c.b16 %v2020, %v2018
    %v2147 = vpack.c.b16 %v2021, %v2019
    %v2148 = vpack.c.b16 %v2024, %v2022
    %v2149 = vpack.c.b16 %v2025, %v2023
    %v2150 = vpack.c.b16 %v2028, %v2026
    %v2151 = vpack.c.b16 %v2029, %v2027
    %v2152 = vpack.c.b16 %v2032, %v2030
    %v2153 = vpack.c.b16 %v2033, %v2031
    %v2154 = vpack.c.b16 %v2036, %v2034
    %v2155 = vpack.c.b16 %v2037, %v2035
    %v2156 = vpack.c.b16 %v2040, %v2038
    %v2157 = vpack.c.b16 %v2041, %v2039
    %v2158 = vpack.c.b16 %v2044, %v2042
    %v2159 = vpack.c.b16 %v2045, %v2043
    %v2160 = vpack.c.b16 %v2048, %v2046
    %v2161 = vpack.c.b16 %v2049, %v2047
    %v2162 = vpack.c.b16 %v2052, %v2050
    %v2163 = vpack.c.b16 %v2053, %v2051
    %v2164 = vpack.c.b16 %v2056, %v2054
    %v2165 = vpack.c.b16 %v2057, %v2055
    %v2166 = vpack.c.b16 %v2060, %v2058
    %v2167 = vpack.c.b16 %v2061, %v2059
    %v2168 = vpack.c.b16 %v2064, %v2062
    %v2169 = vpack.c.b16 %v2065, %v2063
    %v2170 = vpack.c.b16 %v2068, %v2066
    %v2171 = vpack.c.b16 %v2069, %v2067
    %v2172 = vpack.c.b16 %v2072, %v2070
    %v2173 = vpack.c.b16 %v2073, %v2071
    %v2174 = vpack.c.b16 %v2076, %v2074
    %v2175 = vpack.c.b16 %v2077, %v2075
    %v2176 = vpack.c.b16 %v2080, %v2078
    %v2177 = vpack.c.b16 %v2081, %v2079
    %2274 = vmatprep.subr.bf16.mxu0 %v2083
    %2275 = vmatpush1.bf16.msra.mxu0 %v2082
    %2276 = vmatprep.subr.bf16.mxu0 %v2085
    %2277 = vmatpush1.bf16.msra.mxu0 %v2084
    %2278 = vmatprep.subr.bf16.mxu0 %v2087
    %2279 = vmatpush1.bf16.msra.mxu0 %v2086
    %2280 = vmatprep.subr.bf16.mxu0 %v2089
    %2281 = vmatpush1.bf16.msra.mxu0 %v2088
    %2282 = vmatprep.subr.bf16.mxu0 %v2091
    %2283 = vmatpush1.bf16.msra.mxu0 %v2090
    %2284 = vmatprep.subr.bf16.mxu0 %v2093
    %2285 = vmatpush1.bf16.msra.mxu0 %v2092
    %2286 = vmatprep.subr.bf16.mxu0 %v2095
    %2287 = vmatpush1.bf16.msra.mxu0 %v2094
    %2288 = vmatprep.subr.bf16.mxu0 %v2097
    %2289 = vmatpush1.bf16.msra.mxu0 %v2096
    %2290 = vmatprep.subr.bf16.mxu0 %v2099
    %2291 = vmatpush1.bf16.msra.mxu0 %v2098
    %2292 = vmatprep.subr.bf16.mxu0 %v2101
    %2293 = vmatpush1.bf16.msra.mxu0 %v2100
    %2294 = vmatprep.subr.bf16.mxu0 %v2103
    %2295 = vmatpush1.bf16.msra.mxu0 %v2102
    %2296 = vmatprep.subr.bf16.mxu0 %v2105
    %2297 = vmatpush1.bf16.msra.mxu0 %v2104
    %2298 = vmatprep.subr.bf16.mxu0 %v2107
    %2299 = vmatpush1.bf16.msra.mxu0 %v2106
    %2300 = vmatprep.subr.bf16.mxu0 %v2109
    %2301 = vmatpush1.bf16.msra.mxu0 %v2108
    %2302 = vmatprep.subr.bf16.mxu0 %v2111
    %2303 = vmatpush1.bf16.msra.mxu0 %v2110
    %2304 = vmatprep.subr.bf16.mxu0 %v2113
    %2305 = vmatpush1.bf16.msra.mxu0 %v2112
    %2306 = vmatprep.mubr.bf16.mxu0 %v1689
    %2307 = vmatmul.mubr.bf16.gmra.mrb[0].mxu0 %v1688
    %v2308 = vpop.f32.mrb[0].mxu0
    %v2309 = vadd.f32 0.0, %v2308
    %v2310 = vpop.f32.mrb[0].mxu0
    %v2311 = vadd.f32 0.0, %v2310
    %v2312 = vpop.f32.mrb[0].mxu0
    %v2313 = vadd.f32 0.0, %v2312
    %v2314 = vpop.f32.mrb[0].mxu0
    %v2315 = vadd.f32 0.0, %v2314
    %2316 = vdwg.mxu0
    %2317 = vmatprep.subr.bf16.mxu0 %v2115
    %2318 = vmatpush1.bf16.msra.mxu0 %v2114
    %2319 = vmatprep.subr.bf16.mxu0 %v2117
    %2320 = vmatpush1.bf16.msra.mxu0 %v2116
    %2321 = vmatprep.subr.bf16.mxu0 %v2119
    %2322 = vmatpush1.bf16.msra.mxu0 %v2118
    %2323 = vmatprep.subr.bf16.mxu0 %v2121
    %2324 = vmatpush1.bf16.msra.mxu0 %v2120
    %2325 = vmatprep.subr.bf16.mxu0 %v2123
    %2326 = vmatpush1.bf16.msra.mxu0 %v2122
    %2327 = vmatprep.subr.bf16.mxu0 %v2125
    %2328 = vmatpush1.bf16.msra.mxu0 %v2124
    %2329 = vmatprep.subr.bf16.mxu0 %v2127
    %2330 = vmatpush1.bf16.msra.mxu0 %v2126
    %2331 = vmatprep.subr.bf16.mxu0 %v2129
    %2332 = vmatpush1.bf16.msra.mxu0 %v2128
    %2333 = vmatprep.subr.bf16.mxu0 %v2131
    %2334 = vmatpush1.bf16.msra.mxu0 %v2130
    %2335 = vmatprep.subr.bf16.mxu0 %v2133
    %2336 = vmatpush1.bf16.msra.mxu0 %v2132
    %2337 = vmatprep.subr.bf16.mxu0 %v2135
    %2338 = vmatpush1.bf16.msra.mxu0 %v2134
    %2339 = vmatprep.subr.bf16.mxu0 %v2137
    %2340 = vmatpush1.bf16.msra.mxu0 %v2136
    %2341 = vmatprep.subr.bf16.mxu0 %v2139
    %2342 = vmatpush1.bf16.msra.mxu0 %v2138
    %2343 = vmatprep.subr.bf16.mxu0 %v2141
    %2344 = vmatpush1.bf16.msra.mxu0 %v2140
    %2345 = vmatprep.subr.bf16.mxu0 %v2143
    %2346 = vmatpush1.bf16.msra.mxu0 %v2142
    %2347 = vmatprep.subr.bf16.mxu0 %v2145
    %2348 = vmatpush1.bf16.msra.mxu0 %v2144
    %2349 = vmatprep.mubr.bf16.mxu0 %v1691
    %2350 = vmatmul.mubr.bf16.gmra.mrb[0].mxu0 %v1690
    %v2351 = vpop.f32.mrb[0].mxu0
    %v2352 = vadd.f32 %v2309, %v2351
    %v2353 = vpop.f32.mrb[0].mxu0
    %v2354 = vadd.f32 %v2311, %v2353
    %v2355 = vpop.f32.mrb[0].mxu0
    %v2356 = vadd.f32 %v2313, %v2355
    %v2357 = vpop.f32.mrb[0].mxu0
    %v2358 = vadd.f32 %v2315, %v2357
    %2359 = vdwg.mxu0
    %2360 = vmatprep.subr.bf16.mxu0 %v2147
    %2361 = vmatpush1.bf16.msra.mxu0 %v2146
    %2362 = vmatprep.subr.bf16.mxu0 %v2149
    %2363 = vmatpush1.bf16.msra.mxu0 %v2148
    %2364 = vmatprep.subr.bf16.mxu0 %v2151
    %2365 = vmatpush1.bf16.msra.mxu0 %v2150
    %2366 = vmatprep.subr.bf16.mxu0 %v2153
    %2367 = vmatpush1.bf16.msra.mxu0 %v2152
    %2368 = vmatprep.subr.bf16.mxu0 %v2155
    %2369 = vmatpush1.bf16.msra.mxu0 %v2154
    %2370 = vmatprep.subr.bf16.mxu0 %v2157
    %2371 = vmatpush1.bf16.msra.mxu0 %v2156
    %2372 = vmatprep.subr.bf16.mxu0 %v2159
    %2373 = vmatpush1.bf16.msra.mxu0 %v2158
    %2374 = vmatprep.subr.bf16.mxu0 %v2161
    %2375 = vmatpush1.bf16.msra.mxu0 %v2160
    %2376 = vmatprep.subr.bf16.mxu0 %v2163
    %2377 = vmatpush1.bf16.msra.mxu0 %v2162
    %2378 = vmatprep.subr.bf16.mxu0 %v2165
    %2379 = vmatpush1.bf16.msra.mxu0 %v2164
    %2380 = vmatprep.subr.bf16.mxu0 %v2167
    %2381 = vmatpush1.bf16.msra.mxu0 %v2166
    %2382 = vmatprep.subr.bf16.mxu0 %v2169
    %2383 = vmatpush1.bf16.msra.mxu0 %v2168
    %2384 = vmatprep.subr.bf16.mxu0 %v2171
    %2385 = vmatpush1.bf16.msra.mxu0 %v2170
    %2386 = vmatprep.subr.bf16.mxu0 %v2173
    %2387 = vmatpush1.bf16.msra.mxu0 %v2172
    %2388 = vmatprep.subr.bf16.mxu0 %v2175
    %2389 = vmatpush1.bf16.msra.mxu0 %v2174
    %2390 = vmatprep.subr.bf16.mxu0 %v2177
    %2391 = vmatpush1.bf16.msra.mxu0 %v2176
    %2392 = vmatprep.mubr.bf16.mxu0 %v1693
    %2393 = vmatmul.mubr.bf16.gmra.mrb[0].mxu0 %v1692
    %v2394 = vpop.f32.mrb[0].mxu0
    %v2395 = vadd.f32 %v2352, %v2394
    %v2396 = vpop.f32.mrb[0].mxu0
    %v2397 = vadd.f32 %v2354, %v2396
    %v2398 = vpop.f32.mrb[0].mxu0
    %v2399 = vadd.f32 %v2356, %v2398
    %v2400 = vpop.f32.mrb[0].mxu0
    %v2401 = vadd.f32 %v2358, %v2400
    %2402 = vdwg.mxu0
    %v2403 = vadd.f32 %v1694, %v2395
    %v2404 = vadd.f32 %v1695, %v2397
    %v2405 = vadd.f32 %v1696, %v2399
    %v2406 = vadd.f32 %v1697, %v2401
    %2407 = vst [vmem:[#allocation2] sm:$0xff] %v2403
    %2408 = vst [vmem:[#allocation2 + $0x8] sm:$0xff] %v2404
    %2409 = vst [vmem:[#allocation2 + $0x10] sm:$0xff] %v2405
    %2410 = vst [vmem:[#allocation2 + $0x18] sm:$0xff] %v2406
    // Predicated region
    $region42: #{tpu_custom_call.1} parent=1 // pred_check
      %p2411 = pneg %p74
    $region43: #{tpu_custom_call.1} parent=1 // pred_check_branch
      %2413 = sbr.rel (%p2411) target = $region45
    $region44: #{tpu_custom_call.1} parent=1 // pred_region
      %v2414 = vld [vmem:[#allocation2] sm:$0xff]
      %v2415 = vld [vmem:[#allocation2 + $0x8] sm:$0xff]
      %v2416 = vld [vmem:[#allocation2 + $0x10] sm:$0xff]
      %v2417 = vld [vmem:[#allocation2 + $0x18] sm:$0xff]
      %v2418 = vld [vmem:[%s4] sm:$0x3]
      %v2420 = vlaneseq
      %v2421 = vshrl.u32 %v2420, 7
      %v2422 = vsub.s32 0, %v2421
      %v2423 = vrot.slane %v2418, %v2422
      %v2424 = vlaneseq
      %v2425 = vshrl.u32 %v2424, 7
      %v2426 = vsub.s32 1, %v2425
      %v2427 = vrot.slane %v2418, %v2426
      %v2430 = vadd.f32 %v2414, %v2423
      %v2431 = vadd.f32 %v2415, %v2427
      %v2432 = vadd.f32 %v2416, %v2423
      %v2433 = vadd.f32 %v2417, %v2427
      %2434 = vst [vmem:[#allocation11] sm:$0xff] %v2430
      %2435 = vst [vmem:[#allocation11 + $0x8] sm:$0xff] %v2431
      %2436 = vst [vmem:[#allocation11 + $0x10] sm:$0xff] %v2432
      %2437 = vst [vmem:[#allocation11 + $0x18] sm:$0xff] %v2433
    $region45: #{tpu_custom_call.1} parent=1 // pred_fallthru
      _
    // Predicated region
    $region46: #{tpu_custom_call.1} parent=1 // pred_check
      _
    $region47: #{tpu_custom_call.1} parent=1 // pred_check_branch
      %2439 = sbr.rel (0) target = $region49
    $region48: #{tpu_custom_call.1} parent=1 // pred_region
      %s2441 = ssub.s32 512, 512
      %2442 = vsyncadd [#allocation5], %s2441
      %s2443 = sshll.u32 [#allocation11], 4
      %s2444 = int_to_ptr.vmem [resolvable:$true] %s2443
      %2449 = dma.vmem_to_hbm [thread:$0]  %s2444, 512, %s5, [#allocation5], 256, 256, 16
    $region49: #{tpu_custom_call.1} parent=1 // pred_fallthru
      _
    // Predicated region
    $region50: #{tpu_custom_call.1} parent=1 // pred_check
      _
    $region51: #{tpu_custom_call.1} parent=1 // pred_check_branch
      %2451 = sbr.rel (0) target = $region53
    $region52: #{tpu_custom_call.1} parent=1 // pred_region
      %2452 = dma.done [#allocation5], 512
    $region53: #{tpu_custom_call.1} parent=1 // pred_fallthru
      _
    %2453 = vsyncpa [#allocation4], 1
    %2454 = vsyncpa [#allocation7], 1
    %2455 = vsyncpa [#allocation10], 1
    %2456 = vsyncpa [#allocation5], 1

</llo_original>
